<compile_context>
chip_gen: v7x
topology: tpu7x:2x2x1
jax: 0.10.0
libtpu: 0.0.40
codegen_flags: <defaults>
</compile_context>

<pallas_src>
import jax
import jax.numpy as jnp
from jax.experimental import pallas as pl
from jax.experimental.pallas import tpu as pltpu

INPUT_SIZE = 8
HIDDEN_SIZE = 32
NUM_LAYERS = 2      # kernel is written for exactly 2 layers (unrolled below)
OUTPUT_SIZE = 4
BATCH = 4
SEQ = 8

_SUBLANE = 8                                   # f32 sublane count (batch padding)
_IP = ((INPUT_SIZE + 15) // 16) * 16           # input features padded to bf16 tile
_H4 = 4 * HIDDEN_SIZE                          # fused gate lane width (= 128)

# row offsets of each weight block inside the packed bf16 weight slab
_ROW_IH0 = 0
_ROW_HH0 = _ROW_IH0 + _IP                      # 16
_ROW_L1 = _ROW_HH0 + HIDDEN_SIZE               # 48
_ROW_LIN = _ROW_L1 + 2 * HIDDEN_SIZE           # 112
_W_ROWS = _ROW_LIN + HIDDEN_SIZE               # 144


def _sigmoid(x):
    """Single-EUP sigmoid: sigmoid(x) == 0.5 * (tanh(x/2) + 1)."""
    return 0.5 * jnp.tanh(0.5 * x) + 0.5


def gru_model_kernel(x_ref,      # (S*B, IP)   f32  time-major, batch/feature-padded
                     w_ref,      # (144, 128)  bf16 packed weight slab
                     b_ref,      # (4, 128)    f32  packed bias slab
                     out_ref,    # (B, O)      f32
                     gi0_ref):   # (S*B, 128)  f32  VMEM scratch (hoisted projection)
    B = out_ref.shape[0]
    S = x_ref.shape[0] // B
    H = HIDDEN_SIZE
    H2, H3, H4 = 2 * H, 3 * H, 4 * H

    # ---- weight views: bf16, loaded once, all 16-sublane / 128-lane aligned.
    wih0 = w_ref[_ROW_IH0:_ROW_IH0 + _IP, :]       # (IP, 4H)  [r | z | n | 0]
    whh0 = w_ref[_ROW_HH0:_ROW_HH0 + H, :]         # (H, 4H)   [r | z | n | 0]
    w1 = w_ref[_ROW_L1:_ROW_L1 + 2 * H, :]         # (2H, 4H)  rows: [ih; hh]
    wlin = w_ref[_ROW_LIN:_ROW_LIN + H, :]         # (H, 4H)   cols 0:O used

    # ---- hoisted layer-0 input projection: one MXU pass for the whole sequence,
    # staged lane-dense in VMEM.  Columns: [i_r+b, i_z+b, i_n+b_in, b_hn_bcast].
    xf = x_ref[...].astype(jnp.bfloat16)
    gi0_ref[...] = (jnp.dot(xf, wih0, preferred_element_type=jnp.float32)
                    + b_ref[0:1, :])

    # ---- per-step constants broadcast exactly once (JAX doesn't CSE broadcasts).
    b1 = jnp.broadcast_to(b_ref[1:2, :], (B, H4))

    h0 = jnp.zeros((B, H), jnp.float32)
    h1 = jnp.zeros((B, H), jnp.float32)

    # Fully-unrolled recurrence.  Layer-1 step t only depends on h0_t, so the
    # scheduler wavefronts the two layers.  One 128-lane matmul + two EUP ops
    # per layer per step; all gate arithmetic stays in f32.
    for t in range(S):
        gi = gi0_ref[t * B:(t + 1) * B, :]          # (B, 4H), aligned vld

        # layer 0: only the h0-dependent half of the cell sits on the serial chain
        gh = jnp.dot(h0.astype(jnp.bfloat16), whh0,
                     preferred_element_type=jnp.float32)            # (B, 4H)
        rz0 = _sigmoid(gi[:, 0:H2] + gh[:, 0:H2])                   # r|z fused EUP
        n0 = jnp.tanh(gi[:, H2:H3] + rz0[:, 0:H] * (gh[:, H2:H3] + gi[:, H3:H4]))
        h0 = rz0[:, H:H2] * (h0 - n0) + n0

        # layer 1: ONE fused matmul on [h0 | h1] -> [r | z | n_i | n_h]
        hcat = jnp.concatenate([h0, h1], axis=-1).astype(jnp.bfloat16)   # (B, 2H)
        g1 = jnp.dot(hcat, w1, preferred_element_type=jnp.float32) + b1  # (B, 4H)
        rz1 = _sigmoid(g1[:, 0:H2])
        n1 = jnp.tanh(g1[:, H2:H3] + rz1[:, 0:H] * g1[:, H3:H4])
        h1 = rz1[:, H:H2] * (h1 - n1) + n1

    # ---- final Linear on the last layer-1 hidden state.
    res = (jnp.dot(h1.astype(jnp.bfloat16), wlin,
                   preferred_element_type=jnp.float32) + b_ref[2:3, :])
    out_ref[...] = res[:, 0:out_ref.shape[1]].astype(out_ref.dtype)


def init_params(key):
    """PyTorch-layout params, uniform(-1/sqrt(H), 1/sqrt(H)) like nn.GRU/Linear."""
    h = HIDDEN_SIZE
    k = 1.0 / (h ** 0.5)
    keys = jax.random.split(key, 10)

    def u(kk, shape):
        return jax.random.uniform(kk, shape, jnp.float32, minval=-k, maxval=k)

    return {
        # nn.GRU layer 0  (gate order r, z, n along the 3H axis)
        "weight_ih_l0": u(keys[0], (3 * h, INPUT_SIZE)),
        "weight_hh_l0": u(keys[1], (3 * h, h)),
        "bias_ih_l0": u(keys[2], (3 * h,)),
        "bias_hh_l0": u(keys[3], (3 * h,)),
        # nn.GRU layer 1
        "weight_ih_l1": u(keys[4], (3 * h, h)),
        "weight_hh_l1": u(keys[5], (3 * h, h)),
        "bias_ih_l1": u(keys[6], (3 * h,)),
        "bias_hh_l1": u(keys[7], (3 * h,)),
        # nn.Linear
        "linear_w": u(keys[8], (OUTPUT_SIZE, h)),
        "linear_b": u(keys[9], (OUTPUT_SIZE,)),
    }


def pack_params(p):
    """PyTorch layout -> kernel layout.

    * one bf16 weight slab (144, 128): rows [0:16)=W_ih0.T, [16:48)=W_hh0.T,
      [48:112)=layer-1 fused [ih; hh] weights, [112:144)=linear_w.T; each block
      zero-padded to 128 lanes / 16-sublane-aligned rows.
    * one f32 bias slab (4, 128): row0 = layer-0 [b_ir+b_hr | b_iz+b_hz | b_in | b_hn],
      row1 = same for layer 1, row2 = linear bias (cols 0:O), row3 = zeros.
    Done once at data-prep time.
    """
    h = HIDDEN_SIZE
    H2, H3, H4 = 2 * h, 3 * h, 4 * h
    f32 = jnp.float32

    def pad_block(a, rows):
        out = jnp.zeros((rows, H4), f32)
        return out.at[:a.shape[0], :a.shape[1]].set(a)

    wih0 = p["weight_ih_l0"].T          # (I, 3H)   [r | z | n]
    whh0 = p["weight_hh_l0"].T          # (H, 3H)
    wih1 = p["weight_ih_l1"].T          # (H, 3H)
    whh1 = p["weight_hh_l1"].T          # (H, 3H)

    zero_hh = jnp.zeros((h, h), f32)
    # [h0 | h1] @ w1 -> [r | z | n_i | n_h]
    w1_top = jnp.concatenate([wih1, zero_hh], axis=1)                          # (H, 4H)
    w1_bot = jnp.concatenate([whh1[:, :H2], zero_hh, whh1[:, H2:H3]], axis=1)  # (H, 4H)
    w1 = jnp.concatenate([w1_top, w1_bot], axis=0)                             # (2H, 4H)

    w_all = jnp.concatenate([
        pad_block(wih0, _IP),                  # rows 0:16
        pad_block(whh0, h),                    # rows 16:48
        pad_block(w1, 2 * h),                  # rows 48:112
        pad_block(p["linear_w"].T, h),         # rows 112:144
    ], axis=0).astype(jnp.bfloat16)
    assert w_all.shape == (_W_ROWS, _H4)

    def fused_bias(b_ih, b_hh):                # (4H,) = [bir+bhr, biz+bhz, bin, bhn]
        return jnp.concatenate([b_ih[:H2] + b_hh[:H2], b_ih[H2:H3], b_hh[H2:H3]])

    blin = jnp.zeros((H4,), f32).at[:OUTPUT_SIZE].set(p["linear_b"])
    b_all = jnp.stack([
        fused_bias(p["bias_ih_l0"], p["bias_hh_l0"]),
        fused_bias(p["bias_ih_l1"], p["bias_hh_l1"]),
        blin,
        jnp.zeros((H4,), f32),
    ], axis=0)                                 # (4, 128) f32

    return {"w": w_all, "b": b_all}


@jax.jit
def gru_model_forward(x_bsi, kp):
    """x_bsi: (batch, seq, input) f32, like the PyTorch batch_first input."""
    B, S, I = x_bsi.shape
    # Pad batch to a sublane multiple (padded rows are computed then discarded)
    # and the feature dim to a bf16 sublane tile so the packed-weight slices stay
    # tile-aligned.
    Bp = max(_SUBLANE, ((B + _SUBLANE - 1) // _SUBLANE) * _SUBLANE)
    x_pad = jnp.zeros((Bp, S, _IP), x_bsi.dtype).at[:B, :, :I].set(x_bsi)
    x_flat = jnp.transpose(x_pad, (1, 0, 2)).reshape(S * Bp, _IP)  # time-major flat

    vmem = pl.BlockSpec(memory_space=pltpu.MemorySpace.VMEM)
    out = pl.pallas_call(
        gru_model_kernel,
        out_shape=jax.ShapeDtypeStruct((Bp, OUTPUT_SIZE), jnp.float32),
        in_specs=[vmem, vmem, vmem],
        out_specs=vmem,
        scratch_shapes=[pltpu.VMEM((S * Bp, _H4), jnp.float32)],
    )(x_flat, kp["w"], kp["b"])
    return out[:B]


def gru_model_reference(x, p):
    """Plain-JAX f32 reference with exact PyTorch nn.GRU semantics."""
    B, S, _ = x.shape
    h = HIDDEN_SIZE

    def cell(x_t, hs, w_ih, w_hh, b_ih, b_hh):
        gi = x_t @ w_ih.T + b_ih
        gh = hs @ w_hh.T + b_hh
        i_r, i_z, i_n = jnp.split(gi, 3, axis=-1)
        h_r, h_z, h_n = jnp.split(gh, 3, axis=-1)
        r = jax.nn.sigmoid(i_r + h_r)
        z = jax.nn.sigmoid(i_z + h_z)
        n = jnp.tanh(i_n + r * h_n)
        return (1.0 - z) * n + z * hs

    h0 = jnp.zeros((B, h), jnp.float32)
    h1 = jnp.zeros((B, h), jnp.float32)
    for t in range(S):
        h0 = cell(x[:, t, :], h0, p["weight_ih_l0"], p["weight_hh_l0"],
                  p["bias_ih_l0"], p["bias_hh_l0"])
        h1 = cell(h0, h1, p["weight_ih_l1"], p["weight_hh_l1"],
                  p["bias_ih_l1"], p["bias_hh_l1"])
    return h1 @ p["linear_w"].T + p["linear_b"]


if __name__ == "__main__":
    key = jax.random.PRNGKey(0)
    k_x, k_p = jax.random.split(key)
    x = jax.random.normal(k_x, (BATCH, SEQ, INPUT_SIZE), jnp.float32)
    params = init_params(k_p)
    kparams = pack_params(params)

    out = gru_model_forward(x, kparams)
    out = jax.block_until_ready(out)
    assert out.shape == (BATCH, OUTPUT_SIZE)

    # Relaxed tolerance vs the f32 reference: the kernel uses bf16 MXU operands
    # (f32 accumulation), so the 8-step, 2-layer recurrence compounds ~1e-2 of
    # rounding.
    ref = gru_model_reference(x, params)
    max_err = float(jnp.max(jnp.abs(out - ref)))
    assert max_err < 1e-1, f"max abs error {max_err}"

    print("KERNEL_OK")
</pallas_src>

<mosaic_0001>
module attributes {stable_mosaic.version = 11 : i64} {
  func.func @gru_model_kernel(%arg0: memref<64x16xf32, #tpu.memory_space<vmem>>, %arg1: memref<144x128xbf16, #tpu.memory_space<vmem>>, %arg2: memref<4x128xf32, #tpu.memory_space<vmem>>, %arg3: memref<8x4xf32, #tpu.memory_space<vmem>>, %arg4: memref<64x128xf32, #tpu.memory_space<vmem>>) attributes {dimension_semantics = [], scalar_prefetch = 0 : i64, scratch_operands = 1 : i64, tpu.core_type = #tpu.core_type<tc>} {
    %c0 = arith.constant 0 : index
    %c0_0 = arith.constant 0 : index
    %0 = vector.load %arg1[%c0, %c0_0] : memref<144x128xbf16, #tpu.memory_space<vmem>>, vector<16x128xbf16>
    %c16 = arith.constant 16 : index
    %c0_1 = arith.constant 0 : index
    %1 = vector.load %arg1[%c16, %c0_1] : memref<144x128xbf16, #tpu.memory_space<vmem>>, vector<32x128xbf16>
    %c48 = arith.constant 48 : index
    %c0_2 = arith.constant 0 : index
    %2 = vector.load %arg1[%c48, %c0_2] : memref<144x128xbf16, #tpu.memory_space<vmem>>, vector<64x128xbf16>
    %c112 = arith.constant 112 : index
    %c0_3 = arith.constant 0 : index
    %3 = vector.load %arg1[%c112, %c0_3] : memref<144x128xbf16, #tpu.memory_space<vmem>>, vector<32x128xbf16>
    %c0_4 = arith.constant 0 : index
    %c0_5 = arith.constant 0 : index
    %4 = vector.load %arg0[%c0_4, %c0_5] : memref<64x16xf32, #tpu.memory_space<vmem>>, vector<64x16xf32>
    %5 = arith.truncf %4 : vector<64x16xf32> to vector<64x16xbf16>
    %cst = arith.constant dense<0.000000e+00> : vector<64x128xf32>
    %6 = tpu.matmul %5, %0, %cst {dimension_numbers = #tpu.dot_dimension_numbers<[1], [0], [0], [1], [0, 0, 1, 1], [], []>} : vector<64x16xbf16>, vector<16x128xbf16>, vector<64x128xf32> -> vector<64x128xf32>
    %c0_6 = arith.constant 0 : index
    %c0_7 = arith.constant 0 : index
    %7 = vector.load %arg2[%c0_6, %c0_7] : memref<4x128xf32, #tpu.memory_space<vmem>>, vector<1x128xf32>
    %8 = vector.broadcast %7 : vector<1x128xf32> to vector<64x128xf32>
    %9 = arith.addf %6, %8 : vector<64x128xf32>
    %c0_8 = arith.constant 0 : index
    %c0_9 = arith.constant 0 : index
    %10 = vector.load %arg4[%c0_8, %c0_9] : memref<64x128xf32, #tpu.memory_space<vmem>>, vector<64x128xf32>
    tpu.vector_store %arg4[%c0_8, %c0_9], %9 {strides = array<i32>} : memref<64x128xf32, #tpu.memory_space<vmem>>, vector<64x128xf32>,
    %c1 = arith.constant 1 : index
    %c0_10 = arith.constant 0 : index
    %11 = vector.load %arg2[%c1, %c0_10] : memref<4x128xf32, #tpu.memory_space<vmem>>, vector<1x128xf32>
    %12 = vector.shape_cast %11 : vector<1x128xf32> to vector<1x128xf32>
    %13 = vector.broadcast %12 : vector<1x128xf32> to vector<8x128xf32>
    %cst_11 = arith.constant 0.000000e+00 : f32
    %14 = vector.broadcast %cst_11 : f32 to vector<8x32xf32>
    %cst_12 = arith.constant 0.000000e+00 : f32
    %15 = vector.broadcast %cst_12 : f32 to vector<8x32xf32>
    %c0_13 = arith.constant 0 : index
    %c0_14 = arith.constant 0 : index
    %16 = vector.load %arg4[%c0_13, %c0_14] : memref<64x128xf32, #tpu.memory_space<vmem>>, vector<8x128xf32>
    %17 = arith.truncf %14 : vector<8x32xf32> to vector<8x32xbf16>
    %cst_15 = arith.constant dense<0.000000e+00> : vector<8x128xf32>
    %18 = tpu.matmul %17, %1, %cst_15 {dimension_numbers = #tpu.dot_dimension_numbers<[1], [0], [0], [1], [0, 0, 1, 1], [], []>} : vector<8x32xbf16>, vector<32x128xbf16>, vector<8x128xf32> -> vector<8x128xf32>
    %19 = vector.extract_strided_slice %16 {offsets = [0, 0], sizes = [8, 64], strides = [1, 1]} : vector<8x128xf32> to vector<8x64xf32>
    %20 = vector.extract_strided_slice %18 {offsets = [0, 0], sizes = [8, 64], strides = [1, 1]} : vector<8x128xf32> to vector<8x64xf32>
    %21 = arith.addf %19, %20 : vector<8x64xf32>
    %cst_16 = arith.constant 5.000000e-01 : f32
    %22 = vector.broadcast %cst_16 : f32 to vector<8x64xf32>
    %23 = arith.mulf %22, %21 : vector<8x64xf32>
    %24 = math.tanh %23 : vector<8x64xf32>
    %cst_17 = arith.constant 5.000000e-01 : f32
    %25 = vector.broadcast %cst_17 : f32 to vector<8x64xf32>
    %26 = arith.mulf %25, %24 : vector<8x64xf32>
    %cst_18 = arith.constant 5.000000e-01 : f32
    %27 = vector.broadcast %cst_18 : f32 to vector<8x64xf32>
    %28 = arith.addf %26, %27 : vector<8x64xf32>
    %29 = vector.extract_strided_slice %16 {offsets = [0, 64], sizes = [8, 32], strides = [1, 1]} : vector<8x128xf32> to vector<8x32xf32>
    %30 = vector.extract_strided_slice %28 {offsets = [0, 0], sizes = [8, 32], strides = [1, 1]} : vector<8x64xf32> to vector<8x32xf32>
    %31 = vector.extract_strided_slice %18 {offsets = [0, 64], sizes = [8, 32], strides = [1, 1]} : vector<8x128xf32> to vector<8x32xf32>
    %32 = vector.extract_strided_slice %16 {offsets = [0, 96], sizes = [8, 32], strides = [1, 1]} : vector<8x128xf32> to vector<8x32xf32>
    %33 = arith.addf %31, %32 : vector<8x32xf32>
    %34 = arith.mulf %30, %33 : vector<8x32xf32>
    %35 = arith.addf %29, %34 : vector<8x32xf32>
    %36 = math.tanh %35 : vector<8x32xf32>
    %37 = vector.extract_strided_slice %28 {offsets = [0, 32], sizes = [8, 32], strides = [1, 1]} : vector<8x64xf32> to vector<8x32xf32>
    %38 = arith.subf %14, %36 : vector<8x32xf32>
    %39 = arith.mulf %37, %38 : vector<8x32xf32>
    %40 = arith.addf %39, %36 : vector<8x32xf32>
    %41 = tpu.concatenate %40, %15 in 1 : vector<8x32xf32>, vector<8x32xf32> -> vector<8x64xf32>
    %42 = arith.truncf %41 : vector<8x64xf32> to vector<8x64xbf16>
    %cst_19 = arith.constant dense<0.000000e+00> : vector<8x128xf32>
    %43 = tpu.matmul %42, %2, %cst_19 {dimension_numbers = #tpu.dot_dimension_numbers<[1], [0], [0], [1], [0, 0, 1, 1], [], []>} : vector<8x64xbf16>, vector<64x128xbf16>, vector<8x128xf32> -> vector<8x128xf32>
    %44 = arith.addf %43, %13 : vector<8x128xf32>
    %45 = vector.extract_strided_slice %44 {offsets = [0, 0], sizes = [8, 64], strides = [1, 1]} : vector<8x128xf32> to vector<8x64xf32>
    %cst_20 = arith.constant 5.000000e-01 : f32
    %46 = vector.broadcast %cst_20 : f32 to vector<8x64xf32>
    %47 = arith.mulf %46, %45 : vector<8x64xf32>
    %48 = math.tanh %47 : vector<8x64xf32>
    %cst_21 = arith.constant 5.000000e-01 : f32
    %49 = vector.broadcast %cst_21 : f32 to vector<8x64xf32>
    %50 = arith.mulf %49, %48 : vector<8x64xf32>
    %cst_22 = arith.constant 5.000000e-01 : f32
    %51 = vector.broadcast %cst_22 : f32 to vector<8x64xf32>
    %52 = arith.addf %50, %51 : vector<8x64xf32>
    %53 = vector.extract_strided_slice %44 {offsets = [0, 64], sizes = [8, 32], strides = [1, 1]} : vector<8x128xf32> to vector<8x32xf32>
    %54 = vector.extract_strided_slice %52 {offsets = [0, 0], sizes = [8, 32], strides = [1, 1]} : vector<8x64xf32> to vector<8x32xf32>
    %55 = vector.extract_strided_slice %44 {offsets = [0, 96], sizes = [8, 32], strides = [1, 1]} : vector<8x128xf32> to vector<8x32xf32>
    %56 = arith.mulf %54, %55 : vector<8x32xf32>
    %57 = arith.addf %53, %56 : vector<8x32xf32>
    %58 = math.tanh %57 : vector<8x32xf32>
    %59 = vector.extract_strided_slice %52 {offsets = [0, 32], sizes = [8, 32], strides = [1, 1]} : vector<8x64xf32> to vector<8x32xf32>
    %60 = arith.subf %15, %58 : vector<8x32xf32>
    %61 = arith.mulf %59, %60 : vector<8x32xf32>
    %62 = arith.addf %61, %58 : vector<8x32xf32>
    %c8 = arith.constant 8 : index
    %c0_23 = arith.constant 0 : index
    %63 = vector.load %arg4[%c8, %c0_23] : memref<64x128xf32, #tpu.memory_space<vmem>>, vector<8x128xf32>
    %64 = arith.truncf %40 : vector<8x32xf32> to vector<8x32xbf16>
    %cst_24 = arith.constant dense<0.000000e+00> : vector<8x128xf32>
    %65 = tpu.matmul %64, %1, %cst_24 {dimension_numbers = #tpu.dot_dimension_numbers<[1], [0], [0], [1], [0, 0, 1, 1], [], []>} : vector<8x32xbf16>, vector<32x128xbf16>, vector<8x128xf32> -> vector<8x128xf32>
    %66 = vector.extract_strided_slice %63 {offsets = [0, 0], sizes = [8, 64], strides = [1, 1]} : vector<8x128xf32> to vector<8x64xf32>
    %67 = vector.extract_strided_slice %65 {offsets = [0, 0], sizes = [8, 64], strides = [1, 1]} : vector<8x128xf32> to vector<8x64xf32>
    %68 = arith.addf %66, %67 : vector<8x64xf32>
    %cst_25 = arith.constant 5.000000e-01 : f32
    %69 = vector.broadcast %cst_25 : f32 to vector<8x64xf32>
    %70 = arith.mulf %69, %68 : vector<8x64xf32>
    %71 = math.tanh %70 : vector<8x64xf32>
    %cst_26 = arith.constant 5.000000e-01 : f32
    %72 = vector.broadcast %cst_26 : f32 to vector<8x64xf32>
    %73 = arith.mulf %72, %71 : vector<8x64xf32>
    %cst_27 = arith.constant 5.000000e-01 : f32
    %74 = vector.broadcast %cst_27 : f32 to vector<8x64xf32>
    %75 = arith.addf %73, %74 : vector<8x64xf32>
    %76 = vector.extract_strided_slice %63 {offsets = [0, 64], sizes = [8, 32], strides = [1, 1]} : vector<8x128xf32> to vector<8x32xf32>
    %77 = vector.extract_strided_slice %75 {offsets = [0, 0], sizes = [8, 32], strides = [1, 1]} : vector<8x64xf32> to vector<8x32xf32>
    %78 = vector.extract_strided_slice %65 {offsets = [0, 64], sizes = [8, 32], strides = [1, 1]} : vector<8x128xf32> to vector<8x32xf32>
    %79 = vector.extract_strided_slice %63 {offsets = [0, 96], sizes = [8, 32], strides = [1, 1]} : vector<8x128xf32> to vector<8x32xf32>
    %80 = arith.addf %78, %79 : vector<8x32xf32>
    %81 = arith.mulf %77, %80 : vector<8x32xf32>
    %82 = arith.addf %76, %81 : vector<8x32xf32>
    %83 = math.tanh %82 : vector<8x32xf32>
    %84 = vector.extract_strided_slice %75 {offsets = [0, 32], sizes = [8, 32], strides = [1, 1]} : vector<8x64xf32> to vector<8x32xf32>
    %85 = arith.subf %40, %83 : vector<8x32xf32>
    %86 = arith.mulf %84, %85 : vector<8x32xf32>
    %87 = arith.addf %86, %83 : vector<8x32xf32>
    %88 = tpu.concatenate %87, %62 in 1 : vector<8x32xf32>, vector<8x32xf32> -> vector<8x64xf32>
    %89 = arith.truncf %88 : vector<8x64xf32> to vector<8x64xbf16>
    %cst_28 = arith.constant dense<0.000000e+00> : vector<8x128xf32>
    %90 = tpu.matmul %89, %2, %cst_28 {dimension_numbers = #tpu.dot_dimension_numbers<[1], [0], [0], [1], [0, 0, 1, 1], [], []>} : vector<8x64xbf16>, vector<64x128xbf16>, vector<8x128xf32> -> vector<8x128xf32>
    %91 = arith.addf %90, %13 : vector<8x128xf32>
    %92 = vector.extract_strided_slice %91 {offsets = [0, 0], sizes = [8, 64], strides = [1, 1]} : vector<8x128xf32> to vector<8x64xf32>
    %cst_29 = arith.constant 5.000000e-01 : f32
    %93 = vector.broadcast %cst_29 : f32 to vector<8x64xf32>
    %94 = arith.mulf %93, %92 : vector<8x64xf32>
    %95 = math.tanh %94 : vector<8x64xf32>
    %cst_30 = arith.constant 5.000000e-01 : f32
    %96 = vector.broadcast %cst_30 : f32 to vector<8x64xf32>
    %97 = arith.mulf %96, %95 : vector<8x64xf32>
    %cst_31 = arith.constant 5.000000e-01 : f32
    %98 = vector.broadcast %cst_31 : f32 to vector<8x64xf32>
    %99 = arith.addf %97, %98 : vector<8x64xf32>
    %100 = vector.extract_strided_slice %91 {offsets = [0, 64], sizes = [8, 32], strides = [1, 1]} : vector<8x128xf32> to vector<8x32xf32>
    %101 = vector.extract_strided_slice %99 {offsets = [0, 0], sizes = [8, 32], strides = [1, 1]} : vector<8x64xf32> to vector<8x32xf32>
    %102 = vector.extract_strided_slice %91 {offsets = [0, 96], sizes = [8, 32], strides = [1, 1]} : vector<8x128xf32> to vector<8x32xf32>
    %103 = arith.mulf %101, %102 : vector<8x32xf32>
    %104 = arith.addf %100, %103 : vector<8x32xf32>
    %105 = math.tanh %104 : vector<8x32xf32>
    %106 = vector.extract_strided_slice %99 {offsets = [0, 32], sizes = [8, 32], strides = [1, 1]} : vector<8x64xf32> to vector<8x32xf32>
    %107 = arith.subf %62, %105 : vector<8x32xf32>
    %108 = arith.mulf %106, %107 : vector<8x32xf32>
    %109 = arith.addf %108, %105 : vector<8x32xf32>
    %c16_32 = arith.constant 16 : index
    %c0_33 = arith.constant 0 : index
    %110 = vector.load %arg4[%c16_32, %c0_33] : memref<64x128xf32, #tpu.memory_space<vmem>>, vector<8x128xf32>
    %111 = arith.truncf %87 : vector<8x32xf32> to vector<8x32xbf16>
    %cst_34 = arith.constant dense<0.000000e+00> : vector<8x128xf32>
    %112 = tpu.matmul %111, %1, %cst_34 {dimension_numbers = #tpu.dot_dimension_numbers<[1], [0], [0], [1], [0, 0, 1, 1], [], []>} : vector<8x32xbf16>, vector<32x128xbf16>, vector<8x128xf32> -> vector<8x128xf32>
    %113 = vector.extract_strided_slice %110 {offsets = [0, 0], sizes = [8, 64], strides = [1, 1]} : vector<8x128xf32> to vector<8x64xf32>
    %114 = vector.extract_strided_slice %112 {offsets = [0, 0], sizes = [8, 64], strides = [1, 1]} : vector<8x128xf32> to vector<8x64xf32>
    %115 = arith.addf %113, %114 : vector<8x64xf32>
    %cst_35 = arith.constant 5.000000e-01 : f32
    %116 = vector.broadcast %cst_35 : f32 to vector<8x64xf32>
    %117 = arith.mulf %116, %115 : vector<8x64xf32>
    %118 = math.tanh %117 : vector<8x64xf32>
    %cst_36 = arith.constant 5.000000e-01 : f32
    %119 = vector.broadcast %cst_36 : f32 to vector<8x64xf32>
    %120 = arith.mulf %119, %118 : vector<8x64xf32>
    %cst_37 = arith.constant 5.000000e-01 : f32
    %121 = vector.broadcast %cst_37 : f32 to vector<8x64xf32>
    %122 = arith.addf %120, %121 : vector<8x64xf32>
    %123 = vector.extract_strided_slice %110 {offsets = [0, 64], sizes = [8, 32], strides = [1, 1]} : vector<8x128xf32> to vector<8x32xf32>
    %124 = vector.extract_strided_slice %122 {offsets = [0, 0], sizes = [8, 32], strides = [1, 1]} : vector<8x64xf32> to vector<8x32xf32>
    %125 = vector.extract_strided_slice %112 {offsets = [0, 64], sizes = [8, 32], strides = [1, 1]} : vector<8x128xf32> to vector<8x32xf32>
    %126 = vector.extract_strided_slice %110 {offsets = [0, 96], sizes = [8, 32], strides = [1, 1]} : vector<8x128xf32> to vector<8x32xf32>
    %127 = arith.addf %125, %126 : vector<8x32xf32>
    %128 = arith.mulf %124, %127 : vector<8x32xf32>
    %129 = arith.addf %123, %128 : vector<8x32xf32>
    %130 = math.tanh %129 : vector<8x32xf32>
    %131 = vector.extract_strided_slice %122 {offsets = [0, 32], sizes = [8, 32], strides = [1, 1]} : vector<8x64xf32> to vector<8x32xf32>
    %132 = arith.subf %87, %130 : vector<8x32xf32>
    %133 = arith.mulf %131, %132 : vector<8x32xf32>
    %134 = arith.addf %133, %130 : vector<8x32xf32>
    %135 = tpu.concatenate %134, %109 in 1 : vector<8x32xf32>, vector<8x32xf32> -> vector<8x64xf32>
    %136 = arith.truncf %135 : vector<8x64xf32> to vector<8x64xbf16>
    %cst_38 = arith.constant dense<0.000000e+00> : vector<8x128xf32>
    %137 = tpu.matmul %136, %2, %cst_38 {dimension_numbers = #tpu.dot_dimension_numbers<[1], [0], [0], [1], [0, 0, 1, 1], [], []>} : vector<8x64xbf16>, vector<64x128xbf16>, vector<8x128xf32> -> vector<8x128xf32>
    %138 = arith.addf %137, %13 : vector<8x128xf32>
    %139 = vector.extract_strided_slice %138 {offsets = [0, 0], sizes = [8, 64], strides = [1, 1]} : vector<8x128xf32> to vector<8x64xf32>
    %cst_39 = arith.constant 5.000000e-01 : f32
    %140 = vector.broadcast %cst_39 : f32 to vector<8x64xf32>
    %141 = arith.mulf %140, %139 : vector<8x64xf32>
    %142 = math.tanh %141 : vector<8x64xf32>
    %cst_40 = arith.constant 5.000000e-01 : f32
    %143 = vector.broadcast %cst_40 : f32 to vector<8x64xf32>
    %144 = arith.mulf %143, %142 : vector<8x64xf32>
    %cst_41 = arith.constant 5.000000e-01 : f32
    %145 = vector.broadcast %cst_41 : f32 to vector<8x64xf32>
    %146 = arith.addf %144, %145 : vector<8x64xf32>
    %147 = vector.extract_strided_slice %138 {offsets = [0, 64], sizes = [8, 32], strides = [1, 1]} : vector<8x128xf32> to vector<8x32xf32>
    %148 = vector.extract_strided_slice %146 {offsets = [0, 0], sizes = [8, 32], strides = [1, 1]} : vector<8x64xf32> to vector<8x32xf32>
    %149 = vector.extract_strided_slice %138 {offsets = [0, 96], sizes = [8, 32], strides = [1, 1]} : vector<8x128xf32> to vector<8x32xf32>
    %150 = arith.mulf %148, %149 : vector<8x32xf32>
    %151 = arith.addf %147, %150 : vector<8x32xf32>
    %152 = math.tanh %151 : vector<8x32xf32>
    %153 = vector.extract_strided_slice %146 {offsets = [0, 32], sizes = [8, 32], strides = [1, 1]} : vector<8x64xf32> to vector<8x32xf32>
    %154 = arith.subf %109, %152 : vector<8x32xf32>
    %155 = arith.mulf %153, %154 : vector<8x32xf32>
    %156 = arith.addf %155, %152 : vector<8x32xf32>
    %c24 = arith.constant 24 : index
    %c0_42 = arith.constant 0 : index
    %157 = vector.load %arg4[%c24, %c0_42] : memref<64x128xf32, #tpu.memory_space<vmem>>, vector<8x128xf32>
    %158 = arith.truncf %134 : vector<8x32xf32> to vector<8x32xbf16>
    %cst_43 = arith.constant dense<0.000000e+00> : vector<8x128xf32>
    %159 = tpu.matmul %158, %1, %cst_43 {dimension_numbers = #tpu.dot_dimension_numbers<[1], [0], [0], [1], [0, 0, 1, 1], [], []>} : vector<8x32xbf16>, vector<32x128xbf16>, vector<8x128xf32> -> vector<8x128xf32>
    %160 = vector.extract_strided_slice %157 {offsets = [0, 0], sizes = [8, 64], strides = [1, 1]} : vector<8x128xf32> to vector<8x64xf32>
    %161 = vector.extract_strided_slice %159 {offsets = [0, 0], sizes = [8, 64], strides = [1, 1]} : vector<8x128xf32> to vector<8x64xf32>
    %162 = arith.addf %160, %161 : vector<8x64xf32>
    %cst_44 = arith.constant 5.000000e-01 : f32
    %163 = vector.broadcast %cst_44 : f32 to vector<8x64xf32>
    %164 = arith.mulf %163, %162 : vector<8x64xf32>
    %165 = math.tanh %164 : vector<8x64xf32>
    %cst_45 = arith.constant 5.000000e-01 : f32
    %166 = vector.broadcast %cst_45 : f32 to vector<8x64xf32>
    %167 = arith.mulf %166, %165 : vector<8x64xf32>
    %cst_46 = arith.constant 5.000000e-01 : f32
    %168 = vector.broadcast %cst_46 : f32 to vector<8x64xf32>
    %169 = arith.addf %167, %168 : vector<8x64xf32>
    %170 = vector.extract_strided_slice %157 {offsets = [0, 64], sizes = [8, 32], strides = [1, 1]} : vector<8x128xf32> to vector<8x32xf32>
    %171 = vector.extract_strided_slice %169 {offsets = [0, 0], sizes = [8, 32], strides = [1, 1]} : vector<8x64xf32> to vector<8x32xf32>
    %172 = vector.extract_strided_slice %159 {offsets = [0, 64], sizes = [8, 32], strides = [1, 1]} : vector<8x128xf32> to vector<8x32xf32>
    %173 = vector.extract_strided_slice %157 {offsets = [0, 96], sizes = [8, 32], strides = [1, 1]} : vector<8x128xf32> to vector<8x32xf32>
    %174 = arith.addf %172, %173 : vector<8x32xf32>
    %175 = arith.mulf %171, %174 : vector<8x32xf32>
    %176 = arith.addf %170, %175 : vector<8x32xf32>
    %177 = math.tanh %176 : vector<8x32xf32>
    %178 = vector.extract_strided_slice %169 {offsets = [0, 32], sizes = [8, 32], strides = [1, 1]} : vector<8x64xf32> to vector<8x32xf32>
    %179 = arith.subf %134, %177 : vector<8x32xf32>
    %180 = arith.mulf %178, %179 : vector<8x32xf32>
    %181 = arith.addf %180, %177 : vector<8x32xf32>
    %182 = tpu.concatenate %181, %156 in 1 : vector<8x32xf32>, vector<8x32xf32> -> vector<8x64xf32>
    %183 = arith.truncf %182 : vector<8x64xf32> to vector<8x64xbf16>
    %cst_47 = arith.constant dense<0.000000e+00> : vector<8x128xf32>
    %184 = tpu.matmul %183, %2, %cst_47 {dimension_numbers = #tpu.dot_dimension_numbers<[1], [0], [0], [1], [0, 0, 1, 1], [], []>} : vector<8x64xbf16>, vector<64x128xbf16>, vector<8x128xf32> -> vector<8x128xf32>
    %185 = arith.addf %184, %13 : vector<8x128xf32>
    %186 = vector.extract_strided_slice %185 {offsets = [0, 0], sizes = [8, 64], strides = [1, 1]} : vector<8x128xf32> to vector<8x64xf32>
    %cst_48 = arith.constant 5.000000e-01 : f32
    %187 = vector.broadcast %cst_48 : f32 to vector<8x64xf32>
    %188 = arith.mulf %187, %186 : vector<8x64xf32>
    %189 = math.tanh %188 : vector<8x64xf32>
    %cst_49 = arith.constant 5.000000e-01 : f32
    %190 = vector.broadcast %cst_49 : f32 to vector<8x64xf32>
    %191 = arith.mulf %190, %189 : vector<8x64xf32>
    %cst_50 = arith.constant 5.000000e-01 : f32
    %192 = vector.broadcast %cst_50 : f32 to vector<8x64xf32>
    %193 = arith.addf %191, %192 : vector<8x64xf32>
    %194 = vector.extract_strided_slice %185 {offsets = [0, 64], sizes = [8, 32], strides = [1, 1]} : vector<8x128xf32> to vector<8x32xf32>
    %195 = vector.extract_strided_slice %193 {offsets = [0, 0], sizes = [8, 32], strides = [1, 1]} : vector<8x64xf32> to vector<8x32xf32>
    %196 = vector.extract_strided_slice %185 {offsets = [0, 96], sizes = [8, 32], strides = [1, 1]} : vector<8x128xf32> to vector<8x32xf32>
    %197 = arith.mulf %195, %196 : vector<8x32xf32>
    %198 = arith.addf %194, %197 : vector<8x32xf32>
    %199 = math.tanh %198 : vector<8x32xf32>
    %200 = vector.extract_strided_slice %193 {offsets = [0, 32], sizes = [8, 32], strides = [1, 1]} : vector<8x64xf32> to vector<8x32xf32>
    %201 = arith.subf %156, %199 : vector<8x32xf32>
    %202 = arith.mulf %200, %201 : vector<8x32xf32>
    %203 = arith.addf %202, %199 : vector<8x32xf32>
    %c32 = arith.constant 32 : index
    %c0_51 = arith.constant 0 : index
    %204 = vector.load %arg4[%c32, %c0_51] : memref<64x128xf32, #tpu.memory_space<vmem>>, vector<8x128xf32>
    %205 = arith.truncf %181 : vector<8x32xf32> to vector<8x32xbf16>
    %cst_52 = arith.constant dense<0.000000e+00> : vector<8x128xf32>
    %206 = tpu.matmul %205, %1, %cst_52 {dimension_numbers = #tpu.dot_dimension_numbers<[1], [0], [0], [1], [0, 0, 1, 1], [], []>} : vector<8x32xbf16>, vector<32x128xbf16>, vector<8x128xf32> -> vector<8x128xf32>
    %207 = vector.extract_strided_slice %204 {offsets = [0, 0], sizes = [8, 64], strides = [1, 1]} : vector<8x128xf32> to vector<8x64xf32>
    %208 = vector.extract_strided_slice %206 {offsets = [0, 0], sizes = [8, 64], strides = [1, 1]} : vector<8x128xf32> to vector<8x64xf32>
    %209 = arith.addf %207, %208 : vector<8x64xf32>
    %cst_53 = arith.constant 5.000000e-01 : f32
    %210 = vector.broadcast %cst_53 : f32 to vector<8x64xf32>
    %211 = arith.mulf %210, %209 : vector<8x64xf32>
    %212 = math.tanh %211 : vector<8x64xf32>
    %cst_54 = arith.constant 5.000000e-01 : f32
    %213 = vector.broadcast %cst_54 : f32 to vector<8x64xf32>
    %214 = arith.mulf %213, %212 : vector<8x64xf32>
    %cst_55 = arith.constant 5.000000e-01 : f32
    %215 = vector.broadcast %cst_55 : f32 to vector<8x64xf32>
    %216 = arith.addf %214, %215 : vector<8x64xf32>
    %217 = vector.extract_strided_slice %204 {offsets = [0, 64], sizes = [8, 32], strides = [1, 1]} : vector<8x128xf32> to vector<8x32xf32>
    %218 = vector.extract_strided_slice %216 {offsets = [0, 0], sizes = [8, 32], strides = [1, 1]} : vector<8x64xf32> to vector<8x32xf32>
    %219 = vector.extract_strided_slice %206 {offsets = [0, 64], sizes = [8, 32], strides = [1, 1]} : vector<8x128xf32> to vector<8x32xf32>
    %220 = vector.extract_strided_slice %204 {offsets = [0, 96], sizes = [8, 32], strides = [1, 1]} : vector<8x128xf32> to vector<8x32xf32>
    %221 = arith.addf %219, %220 : vector<8x32xf32>
    %222 = arith.mulf %218, %221 : vector<8x32xf32>
    %223 = arith.addf %217, %222 : vector<8x32xf32>
    %224 = math.tanh %223 : vector<8x32xf32>
    %225 = vector.extract_strided_slice %216 {offsets = [0, 32], sizes = [8, 32], strides = [1, 1]} : vector<8x64xf32> to vector<8x32xf32>
    %226 = arith.subf %181, %224 : vector<8x32xf32>
    %227 = arith.mulf %225, %226 : vector<8x32xf32>
    %228 = arith.addf %227, %224 : vector<8x32xf32>
    %229 = tpu.concatenate %228, %203 in 1 : vector<8x32xf32>, vector<8x32xf32> -> vector<8x64xf32>
    %230 = arith.truncf %229 : vector<8x64xf32> to vector<8x64xbf16>
    %cst_56 = arith.constant dense<0.000000e+00> : vector<8x128xf32>
    %231 = tpu.matmul %230, %2, %cst_56 {dimension_numbers = #tpu.dot_dimension_numbers<[1], [0], [0], [1], [0, 0, 1, 1], [], []>} : vector<8x64xbf16>, vector<64x128xbf16>, vector<8x128xf32> -> vector<8x128xf32>
    %232 = arith.addf %231, %13 : vector<8x128xf32>
    %233 = vector.extract_strided_slice %232 {offsets = [0, 0], sizes = [8, 64], strides = [1, 1]} : vector<8x128xf32> to vector<8x64xf32>
    %cst_57 = arith.constant 5.000000e-01 : f32
    %234 = vector.broadcast %cst_57 : f32 to vector<8x64xf32>
    %235 = arith.mulf %234, %233 : vector<8x64xf32>
    %236 = math.tanh %235 : vector<8x64xf32>
    %cst_58 = arith.constant 5.000000e-01 : f32
    %237 = vector.broadcast %cst_58 : f32 to vector<8x64xf32>
    %238 = arith.mulf %237, %236 : vector<8x64xf32>
    %cst_59 = arith.constant 5.000000e-01 : f32
    %239 = vector.broadcast %cst_59 : f32 to vector<8x64xf32>
    %240 = arith.addf %238, %239 : vector<8x64xf32>
    %241 = vector.extract_strided_slice %232 {offsets = [0, 64], sizes = [8, 32], strides = [1, 1]} : vector<8x128xf32> to vector<8x32xf32>
    %242 = vector.extract_strided_slice %240 {offsets = [0, 0], sizes = [8, 32], strides = [1, 1]} : vector<8x64xf32> to vector<8x32xf32>
    %243 = vector.extract_strided_slice %232 {offsets = [0, 96], sizes = [8, 32], strides = [1, 1]} : vector<8x128xf32> to vector<8x32xf32>
    %244 = arith.mulf %242, %243 : vector<8x32xf32>
    %245 = arith.addf %241, %244 : vector<8x32xf32>
    %246 = math.tanh %245 : vector<8x32xf32>
    %247 = vector.extract_strided_slice %240 {offsets = [0, 32], sizes = [8, 32], strides = [1, 1]} : vector<8x64xf32> to vector<8x32xf32>
    %248 = arith.subf %203, %246 : vector<8x32xf32>
    %249 = arith.mulf %247, %248 : vector<8x32xf32>
    %250 = arith.addf %249, %246 : vector<8x32xf32>
    %c40 = arith.constant 40 : index
    %c0_60 = arith.constant 0 : index
    %251 = vector.load %arg4[%c40, %c0_60] : memref<64x128xf32, #tpu.memory_space<vmem>>, vector<8x128xf32>
    %252 = arith.truncf %228 : vector<8x32xf32> to vector<8x32xbf16>
    %cst_61 = arith.constant dense<0.000000e+00> : vector<8x128xf32>
    %253 = tpu.matmul %252, %1, %cst_61 {dimension_numbers = #tpu.dot_dimension_numbers<[1], [0], [0], [1], [0, 0, 1, 1], [], []>} : vector<8x32xbf16>, vector<32x128xbf16>, vector<8x128xf32> -> vector<8x128xf32>
    %254 = vector.extract_strided_slice %251 {offsets = [0, 0], sizes = [8, 64], strides = [1, 1]} : vector<8x128xf32> to vector<8x64xf32>
    %255 = vector.extract_strided_slice %253 {offsets = [0, 0], sizes = [8, 64], strides = [1, 1]} : vector<8x128xf32> to vector<8x64xf32>
    %256 = arith.addf %254, %255 : vector<8x64xf32>
    %cst_62 = arith.constant 5.000000e-01 : f32
    %257 = vector.broadcast %cst_62 : f32 to vector<8x64xf32>
    %258 = arith.mulf %257, %256 : vector<8x64xf32>
    %259 = math.tanh %258 : vector<8x64xf32>
    %cst_63 = arith.constant 5.000000e-01 : f32
    %260 = vector.broadcast %cst_63 : f32 to vector<8x64xf32>
    %261 = arith.mulf %260, %259 : vector<8x64xf32>
    %cst_64 = arith.constant 5.000000e-01 : f32
    %262 = vector.broadcast %cst_64 : f32 to vector<8x64xf32>
    %263 = arith.addf %261, %262 : vector<8x64xf32>
    %264 = vector.extract_strided_slice %251 {offsets = [0, 64], sizes = [8, 32], strides = [1, 1]} : vector<8x128xf32> to vector<8x32xf32>
    %265 = vector.extract_strided_slice %263 {offsets = [0, 0], sizes = [8, 32], strides = [1, 1]} : vector<8x64xf32> to vector<8x32xf32>
    %266 = vector.extract_strided_slice %253 {offsets = [0, 64], sizes = [8, 32], strides = [1, 1]} : vector<8x128xf32> to vector<8x32xf32>
    %267 = vector.extract_strided_slice %251 {offsets = [0, 96], sizes = [8, 32], strides = [1, 1]} : vector<8x128xf32> to vector<8x32xf32>
    %268 = arith.addf %266, %267 : vector<8x32xf32>
    %269 = arith.mulf %265, %268 : vector<8x32xf32>
    %270 = arith.addf %264, %269 : vector<8x32xf32>
    %271 = math.tanh %270 : vector<8x32xf32>
    %272 = vector.extract_strided_slice %263 {offsets = [0, 32], sizes = [8, 32], strides = [1, 1]} : vector<8x64xf32> to vector<8x32xf32>
    %273 = arith.subf %228, %271 : vector<8x32xf32>
    %274 = arith.mulf %272, %273 : vector<8x32xf32>
    %275 = arith.addf %274, %271 : vector<8x32xf32>
    %276 = tpu.concatenate %275, %250 in 1 : vector<8x32xf32>, vector<8x32xf32> -> vector<8x64xf32>
    %277 = arith.truncf %276 : vector<8x64xf32> to vector<8x64xbf16>
    %cst_65 = arith.constant dense<0.000000e+00> : vector<8x128xf32>
    %278 = tpu.matmul %277, %2, %cst_65 {dimension_numbers = #tpu.dot_dimension_numbers<[1], [0], [0], [1], [0, 0, 1, 1], [], []>} : vector<8x64xbf16>, vector<64x128xbf16>, vector<8x128xf32> -> vector<8x128xf32>
    %279 = arith.addf %278, %13 : vector<8x128xf32>
    %280 = vector.extract_strided_slice %279 {offsets = [0, 0], sizes = [8, 64], strides = [1, 1]} : vector<8x128xf32> to vector<8x64xf32>
    %cst_66 = arith.constant 5.000000e-01 : f32
    %281 = vector.broadcast %cst_66 : f32 to vector<8x64xf32>
    %282 = arith.mulf %281, %280 : vector<8x64xf32>
    %283 = math.tanh %282 : vector<8x64xf32>
    %cst_67 = arith.constant 5.000000e-01 : f32
    %284 = vector.broadcast %cst_67 : f32 to vector<8x64xf32>
    %285 = arith.mulf %284, %283 : vector<8x64xf32>
    %cst_68 = arith.constant 5.000000e-01 : f32
    %286 = vector.broadcast %cst_68 : f32 to vector<8x64xf32>
    %287 = arith.addf %285, %286 : vector<8x64xf32>
    %288 = vector.extract_strided_slice %279 {offsets = [0, 64], sizes = [8, 32], strides = [1, 1]} : vector<8x128xf32> to vector<8x32xf32>
    %289 = vector.extract_strided_slice %287 {offsets = [0, 0], sizes = [8, 32], strides = [1, 1]} : vector<8x64xf32> to vector<8x32xf32>
    %290 = vector.extract_strided_slice %279 {offsets = [0, 96], sizes = [8, 32], strides = [1, 1]} : vector<8x128xf32> to vector<8x32xf32>
    %291 = arith.mulf %289, %290 : vector<8x32xf32>
    %292 = arith.addf %288, %291 : vector<8x32xf32>
    %293 = math.tanh %292 : vector<8x32xf32>
    %294 = vector.extract_strided_slice %287 {offsets = [0, 32], sizes = [8, 32], strides = [1, 1]} : vector<8x64xf32> to vector<8x32xf32>
    %295 = arith.subf %250, %293 : vector<8x32xf32>
    %296 = arith.mulf %294, %295 : vector<8x32xf32>
    %297 = arith.addf %296, %293 : vector<8x32xf32>
    %c48_69 = arith.constant 48 : index
    %c0_70 = arith.constant 0 : index
    %298 = vector.load %arg4[%c48_69, %c0_70] : memref<64x128xf32, #tpu.memory_space<vmem>>, vector<8x128xf32>
    %299 = arith.truncf %275 : vector<8x32xf32> to vector<8x32xbf16>
    %cst_71 = arith.constant dense<0.000000e+00> : vector<8x128xf32>
    %300 = tpu.matmul %299, %1, %cst_71 {dimension_numbers = #tpu.dot_dimension_numbers<[1], [0], [0], [1], [0, 0, 1, 1], [], []>} : vector<8x32xbf16>, vector<32x128xbf16>, vector<8x128xf32> -> vector<8x128xf32>
    %301 = vector.extract_strided_slice %298 {offsets = [0, 0], sizes = [8, 64], strides = [1, 1]} : vector<8x128xf32> to vector<8x64xf32>
    %302 = vector.extract_strided_slice %300 {offsets = [0, 0], sizes = [8, 64], strides = [1, 1]} : vector<8x128xf32> to vector<8x64xf32>
    %303 = arith.addf %301, %302 : vector<8x64xf32>
    %cst_72 = arith.constant 5.000000e-01 : f32
    %304 = vector.broadcast %cst_72 : f32 to vector<8x64xf32>
    %305 = arith.mulf %304, %303 : vector<8x64xf32>
    %306 = math.tanh %305 : vector<8x64xf32>
    %cst_73 = arith.constant 5.000000e-01 : f32
    %307 = vector.broadcast %cst_73 : f32 to vector<8x64xf32>
    %308 = arith.mulf %307, %306 : vector<8x64xf32>
    %cst_74 = arith.constant 5.000000e-01 : f32
    %309 = vector.broadcast %cst_74 : f32 to vector<8x64xf32>
    %310 = arith.addf %308, %309 : vector<8x64xf32>
    %311 = vector.extract_strided_slice %298 {offsets = [0, 64], sizes = [8, 32], strides = [1, 1]} : vector<8x128xf32> to vector<8x32xf32>
    %312 = vector.extract_strided_slice %310 {offsets = [0, 0], sizes = [8, 32], strides = [1, 1]} : vector<8x64xf32> to vector<8x32xf32>
    %313 = vector.extract_strided_slice %300 {offsets = [0, 64], sizes = [8, 32], strides = [1, 1]} : vector<8x128xf32> to vector<8x32xf32>
    %314 = vector.extract_strided_slice %298 {offsets = [0, 96], sizes = [8, 32], strides = [1, 1]} : vector<8x128xf32> to vector<8x32xf32>
    %315 = arith.addf %313, %314 : vector<8x32xf32>
    %316 = arith.mulf %312, %315 : vector<8x32xf32>
    %317 = arith.addf %311, %316 : vector<8x32xf32>
    %318 = math.tanh %317 : vector<8x32xf32>
    %319 = vector.extract_strided_slice %310 {offsets = [0, 32], sizes = [8, 32], strides = [1, 1]} : vector<8x64xf32> to vector<8x32xf32>
    %320 = arith.subf %275, %318 : vector<8x32xf32>
    %321 = arith.mulf %319, %320 : vector<8x32xf32>
    %322 = arith.addf %321, %318 : vector<8x32xf32>
    %323 = tpu.concatenate %322, %297 in 1 : vector<8x32xf32>, vector<8x32xf32> -> vector<8x64xf32>
    %324 = arith.truncf %323 : vector<8x64xf32> to vector<8x64xbf16>
    %cst_75 = arith.constant dense<0.000000e+00> : vector<8x128xf32>
    %325 = tpu.matmul %324, %2, %cst_75 {dimension_numbers = #tpu.dot_dimension_numbers<[1], [0], [0], [1], [0, 0, 1, 1], [], []>} : vector<8x64xbf16>, vector<64x128xbf16>, vector<8x128xf32> -> vector<8x128xf32>
    %326 = arith.addf %325, %13 : vector<8x128xf32>
    %327 = vector.extract_strided_slice %326 {offsets = [0, 0], sizes = [8, 64], strides = [1, 1]} : vector<8x128xf32> to vector<8x64xf32>
    %cst_76 = arith.constant 5.000000e-01 : f32
    %328 = vector.broadcast %cst_76 : f32 to vector<8x64xf32>
    %329 = arith.mulf %328, %327 : vector<8x64xf32>
    %330 = math.tanh %329 : vector<8x64xf32>
    %cst_77 = arith.constant 5.000000e-01 : f32
    %331 = vector.broadcast %cst_77 : f32 to vector<8x64xf32>
    %332 = arith.mulf %331, %330 : vector<8x64xf32>
    %cst_78 = arith.constant 5.000000e-01 : f32
    %333 = vector.broadcast %cst_78 : f32 to vector<8x64xf32>
    %334 = arith.addf %332, %333 : vector<8x64xf32>
    %335 = vector.extract_strided_slice %326 {offsets = [0, 64], sizes = [8, 32], strides = [1, 1]} : vector<8x128xf32> to vector<8x32xf32>
    %336 = vector.extract_strided_slice %334 {offsets = [0, 0], sizes = [8, 32], strides = [1, 1]} : vector<8x64xf32> to vector<8x32xf32>
    %337 = vector.extract_strided_slice %326 {offsets = [0, 96], sizes = [8, 32], strides = [1, 1]} : vector<8x128xf32> to vector<8x32xf32>
    %338 = arith.mulf %336, %337 : vector<8x32xf32>
    %339 = arith.addf %335, %338 : vector<8x32xf32>
    %340 = math.tanh %339 : vector<8x32xf32>
    %341 = vector.extract_strided_slice %334 {offsets = [0, 32], sizes = [8, 32], strides = [1, 1]} : vector<8x64xf32> to vector<8x32xf32>
    %342 = arith.subf %297, %340 : vector<8x32xf32>
    %343 = arith.mulf %341, %342 : vector<8x32xf32>
    %344 = arith.addf %343, %340 : vector<8x32xf32>
    %c56 = arith.constant 56 : index
    %c0_79 = arith.constant 0 : index
    %345 = vector.load %arg4[%c56, %c0_79] : memref<64x128xf32, #tpu.memory_space<vmem>>, vector<8x128xf32>
    %346 = arith.truncf %322 : vector<8x32xf32> to vector<8x32xbf16>
    %cst_80 = arith.constant dense<0.000000e+00> : vector<8x128xf32>
    %347 = tpu.matmul %346, %1, %cst_80 {dimension_numbers = #tpu.dot_dimension_numbers<[1], [0], [0], [1], [0, 0, 1, 1], [], []>} : vector<8x32xbf16>, vector<32x128xbf16>, vector<8x128xf32> -> vector<8x128xf32>
    %348 = vector.extract_strided_slice %345 {offsets = [0, 0], sizes = [8, 64], strides = [1, 1]} : vector<8x128xf32> to vector<8x64xf32>
    %349 = vector.extract_strided_slice %347 {offsets = [0, 0], sizes = [8, 64], strides = [1, 1]} : vector<8x128xf32> to vector<8x64xf32>
    %350 = arith.addf %348, %349 : vector<8x64xf32>
    %cst_81 = arith.constant 5.000000e-01 : f32
    %351 = vector.broadcast %cst_81 : f32 to vector<8x64xf32>
    %352 = arith.mulf %351, %350 : vector<8x64xf32>
    %353 = math.tanh %352 : vector<8x64xf32>
    %cst_82 = arith.constant 5.000000e-01 : f32
    %354 = vector.broadcast %cst_82 : f32 to vector<8x64xf32>
    %355 = arith.mulf %354, %353 : vector<8x64xf32>
    %cst_83 = arith.constant 5.000000e-01 : f32
    %356 = vector.broadcast %cst_83 : f32 to vector<8x64xf32>
    %357 = arith.addf %355, %356 : vector<8x64xf32>
    %358 = vector.extract_strided_slice %345 {offsets = [0, 64], sizes = [8, 32], strides = [1, 1]} : vector<8x128xf32> to vector<8x32xf32>
    %359 = vector.extract_strided_slice %357 {offsets = [0, 0], sizes = [8, 32], strides = [1, 1]} : vector<8x64xf32> to vector<8x32xf32>
    %360 = vector.extract_strided_slice %347 {offsets = [0, 64], sizes = [8, 32], strides = [1, 1]} : vector<8x128xf32> to vector<8x32xf32>
    %361 = vector.extract_strided_slice %345 {offsets = [0, 96], sizes = [8, 32], strides = [1, 1]} : vector<8x128xf32> to vector<8x32xf32>
    %362 = arith.addf %360, %361 : vector<8x32xf32>
    %363 = arith.mulf %359, %362 : vector<8x32xf32>
    %364 = arith.addf %358, %363 : vector<8x32xf32>
    %365 = math.tanh %364 : vector<8x32xf32>
    %366 = vector.extract_strided_slice %357 {offsets = [0, 32], sizes = [8, 32], strides = [1, 1]} : vector<8x64xf32> to vector<8x32xf32>
    %367 = arith.subf %322, %365 : vector<8x32xf32>
    %368 = arith.mulf %366, %367 : vector<8x32xf32>
    %369 = arith.addf %368, %365 : vector<8x32xf32>
    %370 = tpu.concatenate %369, %344 in 1 : vector<8x32xf32>, vector<8x32xf32> -> vector<8x64xf32>
    %371 = arith.truncf %370 : vector<8x64xf32> to vector<8x64xbf16>
    %cst_84 = arith.constant dense<0.000000e+00> : vector<8x128xf32>
    %372 = tpu.matmul %371, %2, %cst_84 {dimension_numbers = #tpu.dot_dimension_numbers<[1], [0], [0], [1], [0, 0, 1, 1], [], []>} : vector<8x64xbf16>, vector<64x128xbf16>, vector<8x128xf32> -> vector<8x128xf32>
    %373 = arith.addf %372, %13 : vector<8x128xf32>
    %374 = vector.extract_strided_slice %373 {offsets = [0, 0], sizes = [8, 64], strides = [1, 1]} : vector<8x128xf32> to vector<8x64xf32>
    %cst_85 = arith.constant 5.000000e-01 : f32
    %375 = vector.broadcast %cst_85 : f32 to vector<8x64xf32>
    %376 = arith.mulf %375, %374 : vector<8x64xf32>
    %377 = math.tanh %376 : vector<8x64xf32>
    %cst_86 = arith.constant 5.000000e-01 : f32
    %378 = vector.broadcast %cst_86 : f32 to vector<8x64xf32>
    %379 = arith.mulf %378, %377 : vector<8x64xf32>
    %cst_87 = arith.constant 5.000000e-01 : f32
    %380 = vector.broadcast %cst_87 : f32 to vector<8x64xf32>
    %381 = arith.addf %379, %380 : vector<8x64xf32>
    %382 = vector.extract_strided_slice %373 {offsets = [0, 64], sizes = [8, 32], strides = [1, 1]} : vector<8x128xf32> to vector<8x32xf32>
    %383 = vector.extract_strided_slice %381 {offsets = [0, 0], sizes = [8, 32], strides = [1, 1]} : vector<8x64xf32> to vector<8x32xf32>
    %384 = vector.extract_strided_slice %373 {offsets = [0, 96], sizes = [8, 32], strides = [1, 1]} : vector<8x128xf32> to vector<8x32xf32>
    %385 = arith.mulf %383, %384 : vector<8x32xf32>
    %386 = arith.addf %382, %385 : vector<8x32xf32>
    %387 = math.tanh %386 : vector<8x32xf32>
    %388 = vector.extract_strided_slice %381 {offsets = [0, 32], sizes = [8, 32], strides = [1, 1]} : vector<8x64xf32> to vector<8x32xf32>
    %389 = arith.subf %344, %387 : vector<8x32xf32>
    %390 = arith.mulf %388, %389 : vector<8x32xf32>
    %391 = arith.addf %390, %387 : vector<8x32xf32>
    %392 = arith.truncf %391 : vector<8x32xf32> to vector<8x32xbf16>
    %cst_88 = arith.constant dense<0.000000e+00> : vector<8x128xf32>
    %393 = tpu.matmul %392, %3, %cst_88 {dimension_numbers = #tpu.dot_dimension_numbers<[1], [0], [0], [1], [0, 0, 1, 1], [], []>} : vector<8x32xbf16>, vector<32x128xbf16>, vector<8x128xf32> -> vector<8x128xf32>
    %c2 = arith.constant 2 : index
    %c0_89 = arith.constant 0 : index
    %394 = vector.load %arg2[%c2, %c0_89] : memref<4x128xf32, #tpu.memory_space<vmem>>, vector<1x128xf32>
    %395 = vector.broadcast %394 : vector<1x128xf32> to vector<8x128xf32>
    %396 = arith.addf %393, %395 : vector<8x128xf32>
    %397 = vector.extract_strided_slice %396 {offsets = [0, 0], sizes = [8, 4], strides = [1, 1]} : vector<8x128xf32> to vector<8x4xf32>
    %c0_90 = arith.constant 0 : index
    %c0_91 = arith.constant 0 : index
    %398 = vector.load %arg3[%c0_90, %c0_91] : memref<8x4xf32, #tpu.memory_space<vmem>>, vector<8x4xf32>
    tpu.vector_store %arg3[%c0_90, %c0_91], %397 {strides = array<i32>} : memref<8x4xf32, #tpu.memory_space<vmem>>, vector<8x4xf32>,
    return
  }
}

</mosaic_0001>

<llo_original>
// kernel: gru_model_forward.1
$region0: #{gru_model_forward.1}
  #allocation0 [shape = 'u32[]', space=smem, size = 0x4, offset = 0x4, fixed_abs, tag = 'smem constant byte address 0x4 - core index']
  #allocation1 [shape = 'u32[144,128]{1,0:T(1,128)}', space=vmem, size = 0x12000, scoped, tag = 'internal scratch']
  #allocation2 [shape = 'f32[64,128]{1,0:T(8,128)}', space=vmem, size = 0x8000, scoped, tag = 'scratch operand']
  %s0 = inlined_call_operand.vmem [shape: f32[64,16], index: 0, kind: input, shape index: {}]
  %s1 = inlined_call_operand.vmem [shape: bf16[144,128], index: 1, kind: input, shape index: {}]
  %s2 = inlined_call_operand.vmem [shape: f32[4,128], index: 2, kind: input, shape index: {}]
  %s3 = inlined_call_operand.vmem [shape: f32[8,4], index: 3, kind: output, shape index: {}]
  %s4 = sld [smem:[#allocation0]]
  $region22: #{gru_model_forward.1} parent=0
    _
  %s6 = ssub.s32 1, %s4
  %s7 = scalar_select 0, %s6, %s4
  // Predicated region
  $region2: #{gru_model_forward.1} parent=0 // pred_check
    _
  $region3: #{gru_model_forward.1} parent=0 // pred_check_branch
    %9 = sbr.rel (0) target = $region5
  $region4: #{gru_model_forward.1} parent=0 // pred_region
    _
  $region5: #{gru_model_forward.1} parent=0 // pred_fallthru
    _
  // Predicated region
  $region6: #{gru_model_forward.1} parent=0 // pred_check
    _
  $region7: #{gru_model_forward.1} parent=0 // pred_check_branch
    %11 = sbr.rel (0) target = $region9
  $region8: #{gru_model_forward.1} parent=0 // pred_region
    _
  $region9: #{gru_model_forward.1} parent=0 // pred_fallthru
    _
  // Predicated region
  $region10: #{gru_model_forward.1} parent=0 // pred_check
    _
  $region11: #{gru_model_forward.1} parent=0 // pred_check_branch
    %13 = sbr.rel (0) target = $region13
  $region12: #{gru_model_forward.1} parent=0 // pred_region
    _
  $region13: #{gru_model_forward.1} parent=0 // pred_fallthru
    _
  %v15 = vld [vmem:[%s1] sm:$0xf]
  %v16 = vld [vmem:[%s1 + $0x4] sm:$0xf]
  %v17 = vld [vmem:[%s1 + $0x8] sm:$0xf]
  %v18 = vld [vmem:[%s1 + $0xc] sm:$0xf]
  %v19 = vld [vmem:[%s1 + $0x10] sm:$0xf]
  %v20 = vld [vmem:[%s1 + $0x14] sm:$0xf]
  %v21 = vld [vmem:[%s1 + $0x18] sm:$0xf]
  %v22 = vld [vmem:[%s1 + $0x1c] sm:$0xf]
  %v23 = vld [vmem:[%s1 + $0x20] sm:$0xf]
  %v24 = vld [vmem:[%s1 + $0x24] sm:$0xf]
  %v25 = vld [vmem:[%s1 + $0x28] sm:$0xf]
  %v26 = vld [vmem:[%s1 + $0x2c] sm:$0xf]
  %v27 = vld [vmem:[%s1 + $0x30] sm:$0xf]
  %v28 = vld [vmem:[%s1 + $0x34] sm:$0xf]
  %v29 = vld [vmem:[%s1 + $0x38] sm:$0xf]
  %v30 = vld [vmem:[%s1 + $0x3c] sm:$0xf]
  %v31 = vld [vmem:[%s1 + $0x40] sm:$0xf]
  %v32 = vld [vmem:[%s1 + $0x44] sm:$0xf]
  %v33 = vld [vmem:[%s0] sm:$0xff]
  %v34 = vld [vmem:[%s0 + $0x8] sm:$0xff]
  %v35 = vld [vmem:[%s0 + $0x10] sm:$0xff]
  %v36 = vld [vmem:[%s0 + $0x18] sm:$0xff]
  %v37 = vld [vmem:[%s0 + $0x20] sm:$0xff]
  %v38 = vld [vmem:[%s0 + $0x28] sm:$0xff]
  %v39 = vld [vmem:[%s0 + $0x30] sm:$0xff]
  %v40 = vld [vmem:[%s0 + $0x38] sm:$0xff]
  %v41 = vpack.c.bf16 %v34, %v33
  %v42 = vpack.c.bf16 %v36, %v35
  %v43 = vpack.c.bf16 %v38, %v37
  %v44 = vpack.c.bf16 %v40, %v39
  %v45 = vld [vmem:[%s2] sm:$0x1]
  %v46 = vlaneseq
  %v47 = vshrl.u32 %v46, 7
  %v48 = vsub.s32 0, %v47
  %v49 = vrot.slane %v45, %v48
  %v52 = vunpack.c.l.b16 %v15
  %v53 = vunpack.c.l.b16 %v16
  %v54 = vpack.c.b16 %v53, %v52
  %vm56 = vcmask 130048
  %v58 = vsel %vm56, %v41, 0
  %v61 = vsel %vm56, %v42, 0
  %v64 = vsel %vm56, %v43, 0
  %v67 = vsel %vm56, %v44, 0
  %69 = vmatprep.subr.bf16.mxu0 0
  %70 = vmatpush1.bf16.msra.mxu0 %v54
  %71 = vmatprep.subr.bf16.mxu0 0
  %72 = vmatpush1.bf16.msra.mxu0 0
  %73 = vmatprep.subr.bf16.mxu0 0
  %74 = vmatpush1.bf16.msra.mxu0 0
  %75 = vmatprep.subr.bf16.mxu0 0
  %76 = vmatpush1.bf16.msra.mxu0 0
  %77 = vmatprep.subr.bf16.mxu0 0
  %78 = vmatpush1.bf16.msra.mxu0 0
  %79 = vmatprep.subr.bf16.mxu0 0
  %80 = vmatpush1.bf16.msra.mxu0 0
  %81 = vmatprep.subr.bf16.mxu0 0
  %82 = vmatpush1.bf16.msra.mxu0 0
  %83 = vmatprep.subr.bf16.mxu0 0
  %84 = vmatpush1.bf16.msra.mxu0 0
  %85 = vmatprep.subr.bf16.mxu0 0
  %86 = vmatpush1.bf16.msra.mxu0 0
  %87 = vmatprep.subr.bf16.mxu0 0
  %88 = vmatpush1.bf16.msra.mxu0 0
  %89 = vmatprep.subr.bf16.mxu0 0
  %90 = vmatpush1.bf16.msra.mxu0 0
  %91 = vmatprep.subr.bf16.mxu0 0
  %92 = vmatpush1.bf16.msra.mxu0 0
  %93 = vmatprep.subr.bf16.mxu0 0
  %94 = vmatpush1.bf16.msra.mxu0 0
  %95 = vmatprep.subr.bf16.mxu0 0
  %96 = vmatpush1.bf16.msra.mxu0 0
  %97 = vmatprep.subr.bf16.mxu0 0
  %98 = vmatpush1.bf16.msra.mxu0 0
  %99 = vmatprep.subr.bf16.mxu0 0
  %100 = vmatpush1.bf16.msra.mxu0 0
  %101 = vmatprep.mubr.bf16.mxu0 0
  %102 = vmatmul.mubr.bf16.gmra.mrb[0].mxu0 %v58
  %v103 = vpop.f32.mrb[0].mxu0
  %v104 = vadd.f32 %v49, %v103
  %v105 = vpop.f32.mrb[0].mxu0
  %v106 = vpop.f32.mrb[0].mxu0
  %v107 = vadd.f32 %v49, %v106
  %v108 = vpop.f32.mrb[0].mxu0
  %109 = vmatprep.mubr.bf16.mxu0 0
  %110 = vmatmul.mubr.bf16.gmra.mrb[0].mxu0 %v61
  %v111 = vpop.f32.mrb[0].mxu0
  %v112 = vadd.f32 %v49, %v111
  %v113 = vpop.f32.mrb[0].mxu0
  %v114 = vpop.f32.mrb[0].mxu0
  %v115 = vadd.f32 %v49, %v114
  %v116 = vpop.f32.mrb[0].mxu0
  %117 = vmatprep.mubr.bf16.mxu0 0
  %118 = vmatmul.mubr.bf16.gmra.mrb[0].mxu0 %v64
  %v119 = vpop.f32.mrb[0].mxu0
  %v120 = vadd.f32 %v49, %v119
  %v121 = vpop.f32.mrb[0].mxu0
  %v122 = vpop.f32.mrb[0].mxu0
  %v123 = vadd.f32 %v49, %v122
  %v124 = vpop.f32.mrb[0].mxu0
  %125 = vmatprep.mubr.bf16.mxu0 0
  %126 = vmatmul.mubr.bf16.gmra.mrb[0].mxu0 %v67
  %v127 = vpop.f32.mrb[0].mxu0
  %v128 = vadd.f32 %v49, %v127
  %v129 = vpop.f32.mrb[0].mxu0
  %v130 = vpop.f32.mrb[0].mxu0
  %v131 = vadd.f32 %v49, %v130
  %v132 = vpop.f32.mrb[0].mxu0
  %133 = vdwg.mxu0
  %134 = vst [vmem:[#allocation2] sm:$0xff] %v104
  %135 = vst [vmem:[#allocation2 + $0x8] sm:$0xff] %v107
  %136 = vst [vmem:[#allocation2 + $0x10] sm:$0xff] %v112
  %137 = vst [vmem:[#allocation2 + $0x18] sm:$0xff] %v115
  %138 = vst [vmem:[#allocation2 + $0x20] sm:$0xff] %v120
  %139 = vst [vmem:[#allocation2 + $0x28] sm:$0xff] %v123
  %140 = vst [vmem:[#allocation2 + $0x30] sm:$0xff] %v128
  %141 = vst [vmem:[#allocation2 + $0x38] sm:$0xff] %v131
  %v142 = vld [vmem:[%s2 + $0x1] sm:$0x1]
  %v143 = vlaneseq
  %v144 = vshrl.u32 %v143, 7
  %v145 = vsub.s32 0, %v144
  %v146 = vrot.slane %v142, %v145
  %v147 = vld [vmem:[#allocation2] sm:$0xff]
  %v152 = vunpack.c.l.b16 %v17
  %v153 = vunpack.c.l.b16 %v18
  %v154 = vunpack.c.l.b16 %v19
  %v155 = vunpack.c.l.b16 %v20
  %v156 = vpack.c.b16 %v153, %v152
  %v157 = vpack.c.b16 %v155, %v154
  %vm160 = vcmask 261120
  %v162 = vsel %vm160, 0, 0
  %164 = vmatprep.subr.bf16.mxu0 0
  %165 = vmatpush1.bf16.msra.mxu0 %v156
  %166 = vmatprep.subr.bf16.mxu0 0
  %167 = vmatpush1.bf16.msra.mxu0 %v157
  %168 = vmatprep.subr.bf16.mxu0 0
  %169 = vmatpush1.bf16.msra.mxu0 0
  %170 = vmatprep.subr.bf16.mxu0 0
  %171 = vmatpush1.bf16.msra.mxu0 0
  %172 = vmatprep.subr.bf16.mxu0 0
  %173 = vmatpush1.bf16.msra.mxu0 0
  %174 = vmatprep.subr.bf16.mxu0 0
  %175 = vmatpush1.bf16.msra.mxu0 0
  %176 = vmatprep.subr.bf16.mxu0 0
  %177 = vmatpush1.bf16.msra.mxu0 0
  %178 = vmatprep.subr.bf16.mxu0 0
  %179 = vmatpush1.bf16.msra.mxu0 0
  %180 = vmatprep.subr.bf16.mxu0 0
  %181 = vmatpush1.bf16.msra.mxu0 0
  %182 = vmatprep.subr.bf16.mxu0 0
  %183 = vmatpush1.bf16.msra.mxu0 0
  %184 = vmatprep.subr.bf16.mxu0 0
  %185 = vmatpush1.bf16.msra.mxu0 0
  %186 = vmatprep.subr.bf16.mxu0 0
  %187 = vmatpush1.bf16.msra.mxu0 0
  %188 = vmatprep.subr.bf16.mxu0 0
  %189 = vmatpush1.bf16.msra.mxu0 0
  %190 = vmatprep.subr.bf16.mxu0 0
  %191 = vmatpush1.bf16.msra.mxu0 0
  %192 = vmatprep.subr.bf16.mxu0 0
  %193 = vmatpush1.bf16.msra.mxu0 0
  %194 = vmatprep.subr.bf16.mxu0 0
  %195 = vmatpush1.bf16.msra.mxu0 0
  %196 = vmatprep.mubr.bf16.mxu0 0
  %197 = vmatmul.mubr.bf16.gmra.mrb[0].mxu0 %v162
  %v198 = vpop.f32.mrb[0].mxu0
  %v199 = vadd.f32 0.0, %v198
  %v200 = vpop.f32.mrb[0].mxu0
  %v201 = vpop.f32.mrb[0].mxu0
  %v202 = vpop.f32.mrb[0].mxu0
  %203 = vdwg.mxu0
  %v204 = vadd.f32 %v147, %v199
  %v205 = vmul.f32 %v204, 0.5
  %v206 = vtanh.pop %v205
  %v207 = vmul.f32 %v206, 0.5
  %v208 = vadd.f32 %v207, 0.5
  %210 = vrot.lane.b32.xlu0 %v147, 96
  %v211 = vpop.permute.xlu0 %210
  %v213 = vadd.f32 %v199, %v211
  %215 = vrot.lane.b32.xlu0 %v213, 64
  %v216 = vpop.permute.xlu0 %215
  %v218 = vmul.f32 %v208, %v216
  %220 = vrot.lane.b32.xlu0 %v218, 64
  %v221 = vpop.permute.xlu0 %220
  %v223 = vadd.f32 %v147, %v221
  %v224 = vtanh.pop %v223
  %v225 = vsub.f32 0.0, %v224
  %227 = vrot.lane.b32.xlu0 %v225, 96
  %v228 = vpop.permute.xlu0 %227
  %v230 = vmul.f32 %v208, %v228
  %232 = vrot.lane.b32.xlu0 %v224, 96
  %v233 = vpop.permute.xlu0 %232
  %v235 = vadd.f32 %v230, %v233
  %237 = vrot.lane.b32.xlu0 %v235, 96
  %v238 = vpop.permute.xlu0 %237
  %v240 = vsel %vm160, %v238, 0.0
  %v241 = vpack.c.bf16 %v240, %v240
  %v250 = vunpack.c.l.b16 %v21
  %v251 = vunpack.c.l.b16 %v22
  %v252 = vunpack.c.l.b16 %v23
  %v253 = vunpack.c.l.b16 %v24
  %v254 = vunpack.c.l.b16 %v25
  %v255 = vunpack.c.l.b16 %v26
  %v256 = vunpack.c.l.b16 %v27
  %v257 = vunpack.c.l.b16 %v28
  %v258 = vpack.c.b16 %v251, %v250
  %v259 = vpack.c.b16 %v253, %v252
  %v260 = vpack.c.b16 %v255, %v254
  %v261 = vpack.c.b16 %v257, %v256
  %vm266 = vcmask 523264
  %v268 = vsel %vm266, %v241, 0
  %270 = vmatprep.subr.bf16.mxu0 0
  %271 = vmatpush1.bf16.msra.mxu0 %v258
  %272 = vmatprep.subr.bf16.mxu0 0
  %273 = vmatpush1.bf16.msra.mxu0 %v259
  %274 = vmatprep.subr.bf16.mxu0 0
  %275 = vmatpush1.bf16.msra.mxu0 %v260
  %276 = vmatprep.subr.bf16.mxu0 0
  %277 = vmatpush1.bf16.msra.mxu0 %v261
  %278 = vmatprep.subr.bf16.mxu0 0
  %279 = vmatpush1.bf16.msra.mxu0 0
  %280 = vmatprep.subr.bf16.mxu0 0
  %281 = vmatpush1.bf16.msra.mxu0 0
  %282 = vmatprep.subr.bf16.mxu0 0
  %283 = vmatpush1.bf16.msra.mxu0 0
  %284 = vmatprep.subr.bf16.mxu0 0
  %285 = vmatpush1.bf16.msra.mxu0 0
  %286 = vmatprep.subr.bf16.mxu0 0
  %287 = vmatpush1.bf16.msra.mxu0 0
  %288 = vmatprep.subr.bf16.mxu0 0
  %289 = vmatpush1.bf16.msra.mxu0 0
  %290 = vmatprep.subr.bf16.mxu0 0
  %291 = vmatpush1.bf16.msra.mxu0 0
  %292 = vmatprep.subr.bf16.mxu0 0
  %293 = vmatpush1.bf16.msra.mxu0 0
  %294 = vmatprep.subr.bf16.mxu0 0
  %295 = vmatpush1.bf16.msra.mxu0 0
  %296 = vmatprep.subr.bf16.mxu0 0
  %297 = vmatpush1.bf16.msra.mxu0 0
  %298 = vmatprep.subr.bf16.mxu0 0
  %299 = vmatpush1.bf16.msra.mxu0 0
  %300 = vmatprep.subr.bf16.mxu0 0
  %301 = vmatpush1.bf16.msra.mxu0 0
  %302 = vmatprep.mubr.bf16.mxu0 0
  %303 = vmatmul.mubr.bf16.gmra.mrb[0].mxu0 %v268
  %v304 = vpop.f32.mrb[0].mxu0
  %v305 = vadd.f32 %v146, %v304
  %v306 = vpop.f32.mrb[0].mxu0
  %v307 = vpop.f32.mrb[0].mxu0
  %v308 = vpop.f32.mrb[0].mxu0
  %309 = vdwg.mxu0
  %v310 = vmul.f32 %v305, 0.5
  %v311 = vtanh.pop %v310
  %v312 = vmul.f32 %v311, 0.5
  %v313 = vadd.f32 %v312, 0.5
  %315 = vrot.lane.b32.xlu0 %v305, 32
  %v316 = vpop.permute.xlu0 %315
  %v318 = vmul.f32 %v313, %v316
  %320 = vrot.lane.b32.xlu0 %v318, 64
  %v321 = vpop.permute.xlu0 %320
  %v323 = vadd.f32 %v305, %v321
  %v324 = vtanh.pop %v323
  %v325 = vsub.f32 0.0, %v324
  %327 = vrot.lane.b32.xlu0 %v325, 96
  %v328 = vpop.permute.xlu0 %327
  %v330 = vmul.f32 %v313, %v328
  %332 = vrot.lane.b32.xlu0 %v324, 96
  %v333 = vpop.permute.xlu0 %332
  %v335 = vadd.f32 %v330, %v333
  %v336 = vld [vmem:[#allocation2 + $0x8] sm:$0xff]
  %v337 = vpack.c.bf16 %v235, %v235
  %339 = vrot.lane.b32.xlu0 %v337, 96
  %v340 = vpop.permute.xlu0 %339
  %v342 = vsel %vm160, %v340, 0
  %344 = vmatprep.subr.bf16.mxu0 0
  %345 = vmatpush1.bf16.msra.mxu0 %v156
  %346 = vmatprep.subr.bf16.mxu0 0
  %347 = vmatpush1.bf16.msra.mxu0 %v157
  %348 = vmatprep.subr.bf16.mxu0 0
  %349 = vmatpush1.bf16.msra.mxu0 0
  %350 = vmatprep.subr.bf16.mxu0 0
  %351 = vmatpush1.bf16.msra.mxu0 0
  %352 = vmatprep.subr.bf16.mxu0 0
  %353 = vmatpush1.bf16.msra.mxu0 0
  %354 = vmatprep.subr.bf16.mxu0 0
  %355 = vmatpush1.bf16.msra.mxu0 0
  %356 = vmatprep.subr.bf16.mxu0 0
  %357 = vmatpush1.bf16.msra.mxu0 0
  %358 = vmatprep.subr.bf16.mxu0 0
  %359 = vmatpush1.bf16.msra.mxu0 0
  %360 = vmatprep.subr.bf16.mxu0 0
  %361 = vmatpush1.bf16.msra.mxu0 0
  %362 = vmatprep.subr.bf16.mxu0 0
  %363 = vmatpush1.bf16.msra.mxu0 0
  %364 = vmatprep.subr.bf16.mxu0 0
  %365 = vmatpush1.bf16.msra.mxu0 0
  %366 = vmatprep.subr.bf16.mxu0 0
  %367 = vmatpush1.bf16.msra.mxu0 0
  %368 = vmatprep.subr.bf16.mxu0 0
  %369 = vmatpush1.bf16.msra.mxu0 0
  %370 = vmatprep.subr.bf16.mxu0 0
  %371 = vmatpush1.bf16.msra.mxu0 0
  %372 = vmatprep.subr.bf16.mxu0 0
  %373 = vmatpush1.bf16.msra.mxu0 0
  %374 = vmatprep.subr.bf16.mxu0 0
  %375 = vmatpush1.bf16.msra.mxu0 0
  %376 = vmatprep.mubr.bf16.mxu0 0
  %377 = vmatmul.mubr.bf16.gmra.mrb[0].mxu0 %v342
  %v378 = vpop.f32.mrb[0].mxu0
  %v379 = vadd.f32 0.0, %v378
  %v380 = vpop.f32.mrb[0].mxu0
  %v381 = vpop.f32.mrb[0].mxu0
  %v382 = vpop.f32.mrb[0].mxu0
  %383 = vdwg.mxu0
  %v384 = vadd.f32 %v336, %v379
  %v385 = vmul.f32 %v384, 0.5
  %v386 = vtanh.pop %v385
  %v387 = vmul.f32 %v386, 0.5
  %v388 = vadd.f32 %v387, 0.5
  %390 = vrot.lane.b32.xlu0 %v336, 96
  %v391 = vpop.permute.xlu0 %390
  %v393 = vadd.f32 %v379, %v391
  %395 = vrot.lane.b32.xlu0 %v393, 64
  %v396 = vpop.permute.xlu0 %395
  %v398 = vmul.f32 %v388, %v396
  %400 = vrot.lane.b32.xlu0 %v398, 64
  %v401 = vpop.permute.xlu0 %400
  %v403 = vadd.f32 %v336, %v401
  %v404 = vtanh.pop %v403
  %406 = vrot.lane.b32.xlu0 %v404, 96
  %v407 = vpop.permute.xlu0 %406
  %v409 = vsub.f32 %v235, %v407
  %v410 = vmul.f32 %v388, %v409
  %v411 = vadd.f32 %v410, %v407
  %413 = vrot.lane.b32.xlu0 %v411, 96
  %v414 = vpop.permute.xlu0 %413
  %v416 = vsel %vm160, %v414, %v335
  %v417 = vpack.c.bf16 %v416, %v416
  %v419 = vsel %vm266, %v417, 0
  %421 = vmatprep.subr.bf16.mxu0 0
  %422 = vmatpush1.bf16.msra.mxu0 %v258
  %423 = vmatprep.subr.bf16.mxu0 0
  %424 = vmatpush1.bf16.msra.mxu0 %v259
  %425 = vmatprep.subr.bf16.mxu0 0
  %426 = vmatpush1.bf16.msra.mxu0 %v260
  %427 = vmatprep.subr.bf16.mxu0 0
  %428 = vmatpush1.bf16.msra.mxu0 %v261
  %429 = vmatprep.subr.bf16.mxu0 0
  %430 = vmatpush1.bf16.msra.mxu0 0
  %431 = vmatprep.subr.bf16.mxu0 0
  %432 = vmatpush1.bf16.msra.mxu0 0
  %433 = vmatprep.subr.bf16.mxu0 0
  %434 = vmatpush1.bf16.msra.mxu0 0
  %435 = vmatprep.subr.bf16.mxu0 0
  %436 = vmatpush1.bf16.msra.mxu0 0
  %437 = vmatprep.subr.bf16.mxu0 0
  %438 = vmatpush1.bf16.msra.mxu0 0
  %439 = vmatprep.subr.bf16.mxu0 0
  %440 = vmatpush1.bf16.msra.mxu0 0
  %441 = vmatprep.subr.bf16.mxu0 0
  %442 = vmatpush1.bf16.msra.mxu0 0
  %443 = vmatprep.subr.bf16.mxu0 0
  %444 = vmatpush1.bf16.msra.mxu0 0
  %445 = vmatprep.subr.bf16.mxu0 0
  %446 = vmatpush1.bf16.msra.mxu0 0
  %447 = vmatprep.subr.bf16.mxu0 0
  %448 = vmatpush1.bf16.msra.mxu0 0
  %449 = vmatprep.subr.bf16.mxu0 0
  %450 = vmatpush1.bf16.msra.mxu0 0
  %451 = vmatprep.subr.bf16.mxu0 0
  %452 = vmatpush1.bf16.msra.mxu0 0
  %453 = vmatprep.mubr.bf16.mxu0 0
  %454 = vmatmul.mubr.bf16.gmra.mrb[0].mxu0 %v419
  %v455 = vpop.f32.mrb[0].mxu0
  %v456 = vadd.f32 %v146, %v455
  %v457 = vpop.f32.mrb[0].mxu0
  %v458 = vpop.f32.mrb[0].mxu0
  %v459 = vpop.f32.mrb[0].mxu0
  %460 = vdwg.mxu0
  %v461 = vmul.f32 %v456, 0.5
  %v462 = vtanh.pop %v461
  %v463 = vmul.f32 %v462, 0.5
  %v464 = vadd.f32 %v463, 0.5
  %466 = vrot.lane.b32.xlu0 %v456, 32
  %v467 = vpop.permute.xlu0 %466
  %v469 = vmul.f32 %v464, %v467
  %471 = vrot.lane.b32.xlu0 %v469, 64
  %v472 = vpop.permute.xlu0 %471
  %v474 = vadd.f32 %v456, %v472
  %v475 = vtanh.pop %v474
  %477 = vrot.lane.b32.xlu0 %v475, 96
  %v478 = vpop.permute.xlu0 %477
  %v480 = vsub.f32 %v335, %v478
  %v481 = vmul.f32 %v464, %v480
  %v482 = vadd.f32 %v481, %v478
  %v483 = vld [vmem:[#allocation2 + $0x10] sm:$0xff]
  %v484 = vpack.c.bf16 %v411, %v411
  %486 = vrot.lane.b32.xlu0 %v484, 96
  %v487 = vpop.permute.xlu0 %486
  %v489 = vsel %vm160, %v487, 0
  %491 = vmatprep.subr.bf16.mxu0 0
  %492 = vmatpush1.bf16.msra.mxu0 %v156
  %493 = vmatprep.subr.bf16.mxu0 0
  %494 = vmatpush1.bf16.msra.mxu0 %v157
  %495 = vmatprep.subr.bf16.mxu0 0
  %496 = vmatpush1.bf16.msra.mxu0 0
  %497 = vmatprep.subr.bf16.mxu0 0
  %498 = vmatpush1.bf16.msra.mxu0 0
  %499 = vmatprep.subr.bf16.mxu0 0
  %500 = vmatpush1.bf16.msra.mxu0 0
  %501 = vmatprep.subr.bf16.mxu0 0
  %502 = vmatpush1.bf16.msra.mxu0 0
  %503 = vmatprep.subr.bf16.mxu0 0
  %504 = vmatpush1.bf16.msra.mxu0 0
  %505 = vmatprep.subr.bf16.mxu0 0
  %506 = vmatpush1.bf16.msra.mxu0 0
  %507 = vmatprep.subr.bf16.mxu0 0
  %508 = vmatpush1.bf16.msra.mxu0 0
  %509 = vmatprep.subr.bf16.mxu0 0
  %510 = vmatpush1.bf16.msra.mxu0 0
  %511 = vmatprep.subr.bf16.mxu0 0
  %512 = vmatpush1.bf16.msra.mxu0 0
  %513 = vmatprep.subr.bf16.mxu0 0
  %514 = vmatpush1.bf16.msra.mxu0 0
  %515 = vmatprep.subr.bf16.mxu0 0
  %516 = vmatpush1.bf16.msra.mxu0 0
  %517 = vmatprep.subr.bf16.mxu0 0
  %518 = vmatpush1.bf16.msra.mxu0 0
  %519 = vmatprep.subr.bf16.mxu0 0
  %520 = vmatpush1.bf16.msra.mxu0 0
  %521 = vmatprep.subr.bf16.mxu0 0
  %522 = vmatpush1.bf16.msra.mxu0 0
  %523 = vmatprep.mubr.bf16.mxu0 0
  %524 = vmatmul.mubr.bf16.gmra.mrb[0].mxu0 %v489
  %v525 = vpop.f32.mrb[0].mxu0
  %v526 = vadd.f32 0.0, %v525
  %v527 = vpop.f32.mrb[0].mxu0
  %v528 = vpop.f32.mrb[0].mxu0
  %v529 = vpop.f32.mrb[0].mxu0
  %530 = vdwg.mxu0
  %v531 = vadd.f32 %v483, %v526
  %v532 = vmul.f32 %v531, 0.5
  %v533 = vtanh.pop %v532
  %v534 = vmul.f32 %v533, 0.5
  %v535 = vadd.f32 %v534, 0.5
  %537 = vrot.lane.b32.xlu0 %v483, 96
  %v538 = vpop.permute.xlu0 %537
  %v540 = vadd.f32 %v526, %v538
  %542 = vrot.lane.b32.xlu0 %v540, 64
  %v543 = vpop.permute.xlu0 %542
  %v545 = vmul.f32 %v535, %v543
  %547 = vrot.lane.b32.xlu0 %v545, 64
  %v548 = vpop.permute.xlu0 %547
  %v550 = vadd.f32 %v483, %v548
  %v551 = vtanh.pop %v550
  %553 = vrot.lane.b32.xlu0 %v551, 96
  %v554 = vpop.permute.xlu0 %553
  %v556 = vsub.f32 %v411, %v554
  %v557 = vmul.f32 %v535, %v556
  %v558 = vadd.f32 %v557, %v554
  %560 = vrot.lane.b32.xlu0 %v558, 96
  %v561 = vpop.permute.xlu0 %560
  %v563 = vsel %vm160, %v561, %v482
  %v564 = vpack.c.bf16 %v563, %v563
  %v566 = vsel %vm266, %v564, 0
  %568 = vmatprep.subr.bf16.mxu0 0
  %569 = vmatpush1.bf16.msra.mxu0 %v258
  %570 = vmatprep.subr.bf16.mxu0 0
  %571 = vmatpush1.bf16.msra.mxu0 %v259
  %572 = vmatprep.subr.bf16.mxu0 0
  %573 = vmatpush1.bf16.msra.mxu0 %v260
  %574 = vmatprep.subr.bf16.mxu0 0
  %575 = vmatpush1.bf16.msra.mxu0 %v261
  %576 = vmatprep.subr.bf16.mxu0 0
  %577 = vmatpush1.bf16.msra.mxu0 0
  %578 = vmatprep.subr.bf16.mxu0 0
  %579 = vmatpush1.bf16.msra.mxu0 0
  %580 = vmatprep.subr.bf16.mxu0 0
  %581 = vmatpush1.bf16.msra.mxu0 0
  %582 = vmatprep.subr.bf16.mxu0 0
  %583 = vmatpush1.bf16.msra.mxu0 0
  %584 = vmatprep.subr.bf16.mxu0 0
  %585 = vmatpush1.bf16.msra.mxu0 0
  %586 = vmatprep.subr.bf16.mxu0 0
  %587 = vmatpush1.bf16.msra.mxu0 0
  %588 = vmatprep.subr.bf16.mxu0 0
  %589 = vmatpush1.bf16.msra.mxu0 0
  %590 = vmatprep.subr.bf16.mxu0 0
  %591 = vmatpush1.bf16.msra.mxu0 0
  %592 = vmatprep.subr.bf16.mxu0 0
  %593 = vmatpush1.bf16.msra.mxu0 0
  %594 = vmatprep.subr.bf16.mxu0 0
  %595 = vmatpush1.bf16.msra.mxu0 0
  %596 = vmatprep.subr.bf16.mxu0 0
  %597 = vmatpush1.bf16.msra.mxu0 0
  %598 = vmatprep.subr.bf16.mxu0 0
  %599 = vmatpush1.bf16.msra.mxu0 0
  %600 = vmatprep.mubr.bf16.mxu0 0
  %601 = vmatmul.mubr.bf16.gmra.mrb[0].mxu0 %v566
  %v602 = vpop.f32.mrb[0].mxu0
  %v603 = vadd.f32 %v146, %v602
  %v604 = vpop.f32.mrb[0].mxu0
  %v605 = vpop.f32.mrb[0].mxu0
  %v606 = vpop.f32.mrb[0].mxu0
  %607 = vdwg.mxu0
  %v608 = vmul.f32 %v603, 0.5
  %v609 = vtanh.pop %v608
  %v610 = vmul.f32 %v609, 0.5
  %v611 = vadd.f32 %v610, 0.5
  %613 = vrot.lane.b32.xlu0 %v603, 32
  %v614 = vpop.permute.xlu0 %613
  %v616 = vmul.f32 %v611, %v614
  %618 = vrot.lane.b32.xlu0 %v616, 64
  %v619 = vpop.permute.xlu0 %618
  %v621 = vadd.f32 %v603, %v619
  %v622 = vtanh.pop %v621
  %624 = vrot.lane.b32.xlu0 %v622, 96
  %v625 = vpop.permute.xlu0 %624
  %v627 = vsub.f32 %v482, %v625
  %v628 = vmul.f32 %v611, %v627
  %v629 = vadd.f32 %v628, %v625
  %v630 = vld [vmem:[#allocation2 + $0x18] sm:$0xff]
  %v631 = vpack.c.bf16 %v558, %v558
  %633 = vrot.lane.b32.xlu0 %v631, 96
  %v634 = vpop.permute.xlu0 %633
  %v636 = vsel %vm160, %v634, 0
  %638 = vmatprep.subr.bf16.mxu0 0
  %639 = vmatpush1.bf16.msra.mxu0 %v156
  %640 = vmatprep.subr.bf16.mxu0 0
  %641 = vmatpush1.bf16.msra.mxu0 %v157
  %642 = vmatprep.subr.bf16.mxu0 0
  %643 = vmatpush1.bf16.msra.mxu0 0
  %644 = vmatprep.subr.bf16.mxu0 0
  %645 = vmatpush1.bf16.msra.mxu0 0
  %646 = vmatprep.subr.bf16.mxu0 0
  %647 = vmatpush1.bf16.msra.mxu0 0
  %648 = vmatprep.subr.bf16.mxu0 0
  %649 = vmatpush1.bf16.msra.mxu0 0
  %650 = vmatprep.subr.bf16.mxu0 0
  %651 = vmatpush1.bf16.msra.mxu0 0
  %652 = vmatprep.subr.bf16.mxu0 0
  %653 = vmatpush1.bf16.msra.mxu0 0
  %654 = vmatprep.subr.bf16.mxu0 0
  %655 = vmatpush1.bf16.msra.mxu0 0
  %656 = vmatprep.subr.bf16.mxu0 0
  %657 = vmatpush1.bf16.msra.mxu0 0
  %658 = vmatprep.subr.bf16.mxu0 0
  %659 = vmatpush1.bf16.msra.mxu0 0
  %660 = vmatprep.subr.bf16.mxu0 0
  %661 = vmatpush1.bf16.msra.mxu0 0
  %662 = vmatprep.subr.bf16.mxu0 0
  %663 = vmatpush1.bf16.msra.mxu0 0
  %664 = vmatprep.subr.bf16.mxu0 0
  %665 = vmatpush1.bf16.msra.mxu0 0
  %666 = vmatprep.subr.bf16.mxu0 0
  %667 = vmatpush1.bf16.msra.mxu0 0
  %668 = vmatprep.subr.bf16.mxu0 0
  %669 = vmatpush1.bf16.msra.mxu0 0
  %670 = vmatprep.mubr.bf16.mxu0 0
  %671 = vmatmul.mubr.bf16.gmra.mrb[0].mxu0 %v636
  %v672 = vpop.f32.mrb[0].mxu0
  %v673 = vadd.f32 0.0, %v672
  %v674 = vpop.f32.mrb[0].mxu0
  %v675 = vpop.f32.mrb[0].mxu0
  %v676 = vpop.f32.mrb[0].mxu0
  %677 = vdwg.mxu0
  %v678 = vadd.f32 %v630, %v673
  %v679 = vmul.f32 %v678, 0.5
  %v680 = vtanh.pop %v679
  %v681 = vmul.f32 %v680, 0.5
  %v682 = vadd.f32 %v681, 0.5
  %684 = vrot.lane.b32.xlu0 %v630, 96
  %v685 = vpop.permute.xlu0 %684
  %v687 = vadd.f32 %v673, %v685
  %689 = vrot.lane.b32.xlu0 %v687, 64
  %v690 = vpop.permute.xlu0 %689
  %v692 = vmul.f32 %v682, %v690
  %694 = vrot.lane.b32.xlu0 %v692, 64
  %v695 = vpop.permute.xlu0 %694
  %v697 = vadd.f32 %v630, %v695
  %v698 = vtanh.pop %v697
  %700 = vrot.lane.b32.xlu0 %v698, 96
  %v701 = vpop.permute.xlu0 %700
  %v703 = vsub.f32 %v558, %v701
  %v704 = vmul.f32 %v682, %v703
  %v705 = vadd.f32 %v704, %v701
  %707 = vrot.lane.b32.xlu0 %v705, 96
  %v708 = vpop.permute.xlu0 %707
  %v710 = vsel %vm160, %v708, %v629
  %v711 = vpack.c.bf16 %v710, %v710
  %v713 = vsel %vm266, %v711, 0
  %715 = vmatprep.subr.bf16.mxu0 0
  %716 = vmatpush1.bf16.msra.mxu0 %v258
  %717 = vmatprep.subr.bf16.mxu0 0
  %718 = vmatpush1.bf16.msra.mxu0 %v259
  %719 = vmatprep.subr.bf16.mxu0 0
  %720 = vmatpush1.bf16.msra.mxu0 %v260
  %721 = vmatprep.subr.bf16.mxu0 0
  %722 = vmatpush1.bf16.msra.mxu0 %v261
  %723 = vmatprep.subr.bf16.mxu0 0
  %724 = vmatpush1.bf16.msra.mxu0 0
  %725 = vmatprep.subr.bf16.mxu0 0
  %726 = vmatpush1.bf16.msra.mxu0 0
  %727 = vmatprep.subr.bf16.mxu0 0
  %728 = vmatpush1.bf16.msra.mxu0 0
  %729 = vmatprep.subr.bf16.mxu0 0
  %730 = vmatpush1.bf16.msra.mxu0 0
  %731 = vmatprep.subr.bf16.mxu0 0
  %732 = vmatpush1.bf16.msra.mxu0 0
  %733 = vmatprep.subr.bf16.mxu0 0
  %734 = vmatpush1.bf16.msra.mxu0 0
  %735 = vmatprep.subr.bf16.mxu0 0
  %736 = vmatpush1.bf16.msra.mxu0 0
  %737 = vmatprep.subr.bf16.mxu0 0
  %738 = vmatpush1.bf16.msra.mxu0 0
  %739 = vmatprep.subr.bf16.mxu0 0
  %740 = vmatpush1.bf16.msra.mxu0 0
  %741 = vmatprep.subr.bf16.mxu0 0
  %742 = vmatpush1.bf16.msra.mxu0 0
  %743 = vmatprep.subr.bf16.mxu0 0
  %744 = vmatpush1.bf16.msra.mxu0 0
  %745 = vmatprep.subr.bf16.mxu0 0
  %746 = vmatpush1.bf16.msra.mxu0 0
  %747 = vmatprep.mubr.bf16.mxu0 0
  %748 = vmatmul.mubr.bf16.gmra.mrb[0].mxu0 %v713
  %v749 = vpop.f32.mrb[0].mxu0
  %v750 = vadd.f32 %v146, %v749
  %v751 = vpop.f32.mrb[0].mxu0
  %v752 = vpop.f32.mrb[0].mxu0
  %v753 = vpop.f32.mrb[0].mxu0
  %754 = vdwg.mxu0
  %v755 = vmul.f32 %v750, 0.5
  %v756 = vtanh.pop %v755
  %v757 = vmul.f32 %v756, 0.5
  %v758 = vadd.f32 %v757, 0.5
  %760 = vrot.lane.b32.xlu0 %v750, 32
  %v761 = vpop.permute.xlu0 %760
  %v763 = vmul.f32 %v758, %v761
  %765 = vrot.lane.b32.xlu0 %v763, 64
  %v766 = vpop.permute.xlu0 %765
  %v768 = vadd.f32 %v750, %v766
  %v769 = vtanh.pop %v768
  %771 = vrot.lane.b32.xlu0 %v769, 96
  %v772 = vpop.permute.xlu0 %771
  %v774 = vsub.f32 %v629, %v772
  %v775 = vmul.f32 %v758, %v774
  %v776 = vadd.f32 %v775, %v772
  %v777 = vld [vmem:[#allocation2 + $0x20] sm:$0xff]
  %v778 = vpack.c.bf16 %v705, %v705
  %780 = vrot.lane.b32.xlu0 %v778, 96
  %v781 = vpop.permute.xlu0 %780
  %v783 = vsel %vm160, %v781, 0
  %785 = vmatprep.subr.bf16.mxu0 0
  %786 = vmatpush1.bf16.msra.mxu0 %v156
  %787 = vmatprep.subr.bf16.mxu0 0
  %788 = vmatpush1.bf16.msra.mxu0 %v157
  %789 = vmatprep.subr.bf16.mxu0 0
  %790 = vmatpush1.bf16.msra.mxu0 0
  %791 = vmatprep.subr.bf16.mxu0 0
  %792 = vmatpush1.bf16.msra.mxu0 0
  %793 = vmatprep.subr.bf16.mxu0 0
  %794 = vmatpush1.bf16.msra.mxu0 0
  %795 = vmatprep.subr.bf16.mxu0 0
  %796 = vmatpush1.bf16.msra.mxu0 0
  %797 = vmatprep.subr.bf16.mxu0 0
  %798 = vmatpush1.bf16.msra.mxu0 0
  %799 = vmatprep.subr.bf16.mxu0 0
  %800 = vmatpush1.bf16.msra.mxu0 0
  %801 = vmatprep.subr.bf16.mxu0 0
  %802 = vmatpush1.bf16.msra.mxu0 0
  %803 = vmatprep.subr.bf16.mxu0 0
  %804 = vmatpush1.bf16.msra.mxu0 0
  %805 = vmatprep.subr.bf16.mxu0 0
  %806 = vmatpush1.bf16.msra.mxu0 0
  %807 = vmatprep.subr.bf16.mxu0 0
  %808 = vmatpush1.bf16.msra.mxu0 0
  %809 = vmatprep.subr.bf16.mxu0 0
  %810 = vmatpush1.bf16.msra.mxu0 0
  %811 = vmatprep.subr.bf16.mxu0 0
  %812 = vmatpush1.bf16.msra.mxu0 0
  %813 = vmatprep.subr.bf16.mxu0 0
  %814 = vmatpush1.bf16.msra.mxu0 0
  %815 = vmatprep.subr.bf16.mxu0 0
  %816 = vmatpush1.bf16.msra.mxu0 0
  %817 = vmatprep.mubr.bf16.mxu0 0
  %818 = vmatmul.mubr.bf16.gmra.mrb[0].mxu0 %v783
  %v819 = vpop.f32.mrb[0].mxu0
  %v820 = vadd.f32 0.0, %v819
  %v821 = vpop.f32.mrb[0].mxu0
  %v822 = vpop.f32.mrb[0].mxu0
  %v823 = vpop.f32.mrb[0].mxu0
  %824 = vdwg.mxu0
  %v825 = vadd.f32 %v777, %v820
  %v826 = vmul.f32 %v825, 0.5
  %v827 = vtanh.pop %v826
  %v828 = vmul.f32 %v827, 0.5
  %v829 = vadd.f32 %v828, 0.5
  %831 = vrot.lane.b32.xlu0 %v777, 96
  %v832 = vpop.permute.xlu0 %831
  %v834 = vadd.f32 %v820, %v832
  %836 = vrot.lane.b32.xlu0 %v834, 64
  %v837 = vpop.permute.xlu0 %836
  %v839 = vmul.f32 %v829, %v837
  %841 = vrot.lane.b32.xlu0 %v839, 64
  %v842 = vpop.permute.xlu0 %841
  %v844 = vadd.f32 %v777, %v842
  %v845 = vtanh.pop %v844
  %847 = vrot.lane.b32.xlu0 %v845, 96
  %v848 = vpop.permute.xlu0 %847
  %v850 = vsub.f32 %v705, %v848
  %v851 = vmul.f32 %v829, %v850
  %v852 = vadd.f32 %v851, %v848
  %854 = vrot.lane.b32.xlu0 %v852, 96
  %v855 = vpop.permute.xlu0 %854
  %v857 = vsel %vm160, %v855, %v776
  %v858 = vpack.c.bf16 %v857, %v857
  %v860 = vsel %vm266, %v858, 0
  %862 = vmatprep.subr.bf16.mxu0 0
  %863 = vmatpush1.bf16.msra.mxu0 %v258
  %864 = vmatprep.subr.bf16.mxu0 0
  %865 = vmatpush1.bf16.msra.mxu0 %v259
  %866 = vmatprep.subr.bf16.mxu0 0
  %867 = vmatpush1.bf16.msra.mxu0 %v260
  %868 = vmatprep.subr.bf16.mxu0 0
  %869 = vmatpush1.bf16.msra.mxu0 %v261
  %870 = vmatprep.subr.bf16.mxu0 0
  %871 = vmatpush1.bf16.msra.mxu0 0
  %872 = vmatprep.subr.bf16.mxu0 0
  %873 = vmatpush1.bf16.msra.mxu0 0
  %874 = vmatprep.subr.bf16.mxu0 0
  %875 = vmatpush1.bf16.msra.mxu0 0
  %876 = vmatprep.subr.bf16.mxu0 0
  %877 = vmatpush1.bf16.msra.mxu0 0
  %878 = vmatprep.subr.bf16.mxu0 0
  %879 = vmatpush1.bf16.msra.mxu0 0
  %880 = vmatprep.subr.bf16.mxu0 0
  %881 = vmatpush1.bf16.msra.mxu0 0
  %882 = vmatprep.subr.bf16.mxu0 0
  %883 = vmatpush1.bf16.msra.mxu0 0
  %884 = vmatprep.subr.bf16.mxu0 0
  %885 = vmatpush1.bf16.msra.mxu0 0
  %886 = vmatprep.subr.bf16.mxu0 0
  %887 = vmatpush1.bf16.msra.mxu0 0
  %888 = vmatprep.subr.bf16.mxu0 0
  %889 = vmatpush1.bf16.msra.mxu0 0
  %890 = vmatprep.subr.bf16.mxu0 0
  %891 = vmatpush1.bf16.msra.mxu0 0
  %892 = vmatprep.subr.bf16.mxu0 0
  %893 = vmatpush1.bf16.msra.mxu0 0
  %894 = vmatprep.mubr.bf16.mxu0 0
  %895 = vmatmul.mubr.bf16.gmra.mrb[0].mxu0 %v860
  %v896 = vpop.f32.mrb[0].mxu0
  %v897 = vadd.f32 %v146, %v896
  %v898 = vpop.f32.mrb[0].mxu0
  %v899 = vpop.f32.mrb[0].mxu0
  %v900 = vpop.f32.mrb[0].mxu0
  %901 = vdwg.mxu0
  %v902 = vmul.f32 %v897, 0.5
  %v903 = vtanh.pop %v902
  %v904 = vmul.f32 %v903, 0.5
  %v905 = vadd.f32 %v904, 0.5
  %907 = vrot.lane.b32.xlu0 %v897, 32
  %v908 = vpop.permute.xlu0 %907
  %v910 = vmul.f32 %v905, %v908
  %912 = vrot.lane.b32.xlu0 %v910, 64
  %v913 = vpop.permute.xlu0 %912
  %v915 = vadd.f32 %v897, %v913
  %v916 = vtanh.pop %v915
  %918 = vrot.lane.b32.xlu0 %v916, 96
  %v919 = vpop.permute.xlu0 %918
  %v921 = vsub.f32 %v776, %v919
  %v922 = vmul.f32 %v905, %v921
  %v923 = vadd.f32 %v922, %v919
  %v924 = vld [vmem:[#allocation2 + $0x28] sm:$0xff]
  %v925 = vpack.c.bf16 %v852, %v852
  %927 = vrot.lane.b32.xlu0 %v925, 96
  %v928 = vpop.permute.xlu0 %927
  %v930 = vsel %vm160, %v928, 0
  %932 = vmatprep.subr.bf16.mxu0 0
  %933 = vmatpush1.bf16.msra.mxu0 %v156
  %934 = vmatprep.subr.bf16.mxu0 0
  %935 = vmatpush1.bf16.msra.mxu0 %v157
  %936 = vmatprep.subr.bf16.mxu0 0
  %937 = vmatpush1.bf16.msra.mxu0 0
  %938 = vmatprep.subr.bf16.mxu0 0
  %939 = vmatpush1.bf16.msra.mxu0 0
  %940 = vmatprep.subr.bf16.mxu0 0
  %941 = vmatpush1.bf16.msra.mxu0 0
  %942 = vmatprep.subr.bf16.mxu0 0
  %943 = vmatpush1.bf16.msra.mxu0 0
  %944 = vmatprep.subr.bf16.mxu0 0
  %945 = vmatpush1.bf16.msra.mxu0 0
  %946 = vmatprep.subr.bf16.mxu0 0
  %947 = vmatpush1.bf16.msra.mxu0 0
  %948 = vmatprep.subr.bf16.mxu0 0
  %949 = vmatpush1.bf16.msra.mxu0 0
  %950 = vmatprep.subr.bf16.mxu0 0
  %951 = vmatpush1.bf16.msra.mxu0 0
  %952 = vmatprep.subr.bf16.mxu0 0
  %953 = vmatpush1.bf16.msra.mxu0 0
  %954 = vmatprep.subr.bf16.mxu0 0
  %955 = vmatpush1.bf16.msra.mxu0 0
  %956 = vmatprep.subr.bf16.mxu0 0
  %957 = vmatpush1.bf16.msra.mxu0 0
  %958 = vmatprep.subr.bf16.mxu0 0
  %959 = vmatpush1.bf16.msra.mxu0 0
  %960 = vmatprep.subr.bf16.mxu0 0
  %961 = vmatpush1.bf16.msra.mxu0 0
  %962 = vmatprep.subr.bf16.mxu0 0
  %963 = vmatpush1.bf16.msra.mxu0 0
  %964 = vmatprep.mubr.bf16.mxu0 0
  %965 = vmatmul.mubr.bf16.gmra.mrb[0].mxu0 %v930
  %v966 = vpop.f32.mrb[0].mxu0
  %v967 = vadd.f32 0.0, %v966
  %v968 = vpop.f32.mrb[0].mxu0
  %v969 = vpop.f32.mrb[0].mxu0
  %v970 = vpop.f32.mrb[0].mxu0
  %971 = vdwg.mxu0
  %v972 = vadd.f32 %v924, %v967
  %v973 = vmul.f32 %v972, 0.5
  %v974 = vtanh.pop %v973
  %v975 = vmul.f32 %v974, 0.5
  %v976 = vadd.f32 %v975, 0.5
  %978 = vrot.lane.b32.xlu0 %v924, 96
  %v979 = vpop.permute.xlu0 %978
  %v981 = vadd.f32 %v967, %v979
  %983 = vrot.lane.b32.xlu0 %v981, 64
  %v984 = vpop.permute.xlu0 %983
  %v986 = vmul.f32 %v976, %v984
  %988 = vrot.lane.b32.xlu0 %v986, 64
  %v989 = vpop.permute.xlu0 %988
  %v991 = vadd.f32 %v924, %v989
  %v992 = vtanh.pop %v991
  %994 = vrot.lane.b32.xlu0 %v992, 96
  %v995 = vpop.permute.xlu0 %994
  %v997 = vsub.f32 %v852, %v995
  %v998 = vmul.f32 %v976, %v997
  %v999 = vadd.f32 %v998, %v995
  %1001 = vrot.lane.b32.xlu0 %v999, 96
  %v1002 = vpop.permute.xlu0 %1001
  %v1004 = vsel %vm160, %v1002, %v923
  %v1005 = vpack.c.bf16 %v1004, %v1004
  %v1007 = vsel %vm266, %v1005, 0
  %1009 = vmatprep.subr.bf16.mxu0 0
  %1010 = vmatpush1.bf16.msra.mxu0 %v258
  %1011 = vmatprep.subr.bf16.mxu0 0
  %1012 = vmatpush1.bf16.msra.mxu0 %v259
  %1013 = vmatprep.subr.bf16.mxu0 0
  %1014 = vmatpush1.bf16.msra.mxu0 %v260
  %1015 = vmatprep.subr.bf16.mxu0 0
  %1016 = vmatpush1.bf16.msra.mxu0 %v261
  %1017 = vmatprep.subr.bf16.mxu0 0
  %1018 = vmatpush1.bf16.msra.mxu0 0
  %1019 = vmatprep.subr.bf16.mxu0 0
  %1020 = vmatpush1.bf16.msra.mxu0 0
  %1021 = vmatprep.subr.bf16.mxu0 0
  %1022 = vmatpush1.bf16.msra.mxu0 0
  %1023 = vmatprep.subr.bf16.mxu0 0
  %1024 = vmatpush1.bf16.msra.mxu0 0
  %1025 = vmatprep.subr.bf16.mxu0 0
  %1026 = vmatpush1.bf16.msra.mxu0 0
  %1027 = vmatprep.subr.bf16.mxu0 0
  %1028 = vmatpush1.bf16.msra.mxu0 0
  %1029 = vmatprep.subr.bf16.mxu0 0
  %1030 = vmatpush1.bf16.msra.mxu0 0
  %1031 = vmatprep.subr.bf16.mxu0 0
  %1032 = vmatpush1.bf16.msra.mxu0 0
  %1033 = vmatprep.subr.bf16.mxu0 0
  %1034 = vmatpush1.bf16.msra.mxu0 0
  %1035 = vmatprep.subr.bf16.mxu0 0
  %1036 = vmatpush1.bf16.msra.mxu0 0
  %1037 = vmatprep.subr.bf16.mxu0 0
  %1038 = vmatpush1.bf16.msra.mxu0 0
  %1039 = vmatprep.subr.bf16.mxu0 0
  %1040 = vmatpush1.bf16.msra.mxu0 0
  %1041 = vmatprep.mubr.bf16.mxu0 0
  %1042 = vmatmul.mubr.bf16.gmra.mrb[0].mxu0 %v1007
  %v1043 = vpop.f32.mrb[0].mxu0
  %v1044 = vadd.f32 %v146, %v1043
  %v1045 = vpop.f32.mrb[0].mxu0
  %v1046 = vpop.f32.mrb[0].mxu0
  %v1047 = vpop.f32.mrb[0].mxu0
  %1048 = vdwg.mxu0
  %v1049 = vmul.f32 %v1044, 0.5
  %v1050 = vtanh.pop %v1049
  %v1051 = vmul.f32 %v1050, 0.5
  %v1052 = vadd.f32 %v1051, 0.5
  %1054 = vrot.lane.b32.xlu0 %v1044, 32
  %v1055 = vpop.permute.xlu0 %1054
  %v1057 = vmul.f32 %v1052, %v1055
  %1059 = vrot.lane.b32.xlu0 %v1057, 64
  %v1060 = vpop.permute.xlu0 %1059
  %v1062 = vadd.f32 %v1044, %v1060
  %v1063 = vtanh.pop %v1062
  %1065 = vrot.lane.b32.xlu0 %v1063, 96
  %v1066 = vpop.permute.xlu0 %1065
  %v1068 = vsub.f32 %v923, %v1066
  %v1069 = vmul.f32 %v1052, %v1068
  %v1070 = vadd.f32 %v1069, %v1066
  %v1071 = vld [vmem:[#allocation2 + $0x30] sm:$0xff]
  %v1072 = vpack.c.bf16 %v999, %v999
  %1074 = vrot.lane.b32.xlu0 %v1072, 96
  %v1075 = vpop.permute.xlu0 %1074
  %v1077 = vsel %vm160, %v1075, 0
  %1079 = vmatprep.subr.bf16.mxu0 0
  %1080 = vmatpush1.bf16.msra.mxu0 %v156
  %1081 = vmatprep.subr.bf16.mxu0 0
  %1082 = vmatpush1.bf16.msra.mxu0 %v157
  %1083 = vmatprep.subr.bf16.mxu0 0
  %1084 = vmatpush1.bf16.msra.mxu0 0
  %1085 = vmatprep.subr.bf16.mxu0 0
  %1086 = vmatpush1.bf16.msra.mxu0 0
  %1087 = vmatprep.subr.bf16.mxu0 0
  %1088 = vmatpush1.bf16.msra.mxu0 0
  %1089 = vmatprep.subr.bf16.mxu0 0
  %1090 = vmatpush1.bf16.msra.mxu0 0
  %1091 = vmatprep.subr.bf16.mxu0 0
  %1092 = vmatpush1.bf16.msra.mxu0 0
  %1093 = vmatprep.subr.bf16.mxu0 0
  %1094 = vmatpush1.bf16.msra.mxu0 0
  %1095 = vmatprep.subr.bf16.mxu0 0
  %1096 = vmatpush1.bf16.msra.mxu0 0
  %1097 = vmatprep.subr.bf16.mxu0 0
  %1098 = vmatpush1.bf16.msra.mxu0 0
  %1099 = vmatprep.subr.bf16.mxu0 0
  %1100 = vmatpush1.bf16.msra.mxu0 0
  %1101 = vmatprep.subr.bf16.mxu0 0
  %1102 = vmatpush1.bf16.msra.mxu0 0
  %1103 = vmatprep.subr.bf16.mxu0 0
  %1104 = vmatpush1.bf16.msra.mxu0 0
  %1105 = vmatprep.subr.bf16.mxu0 0
  %1106 = vmatpush1.bf16.msra.mxu0 0
  %1107 = vmatprep.subr.bf16.mxu0 0
  %1108 = vmatpush1.bf16.msra.mxu0 0
  %1109 = vmatprep.subr.bf16.mxu0 0
  %1110 = vmatpush1.bf16.msra.mxu0 0
  %1111 = vmatprep.mubr.bf16.mxu0 0
  %1112 = vmatmul.mubr.bf16.gmra.mrb[0].mxu0 %v1077
  %v1113 = vpop.f32.mrb[0].mxu0
  %v1114 = vadd.f32 0.0, %v1113
  %v1115 = vpop.f32.mrb[0].mxu0
  %v1116 = vpop.f32.mrb[0].mxu0
  %v1117 = vpop.f32.mrb[0].mxu0
  %1118 = vdwg.mxu0
  %v1119 = vadd.f32 %v1071, %v1114
  %v1120 = vmul.f32 %v1119, 0.5
  %v1121 = vtanh.pop %v1120
  %v1122 = vmul.f32 %v1121, 0.5
  %v1123 = vadd.f32 %v1122, 0.5
  %1125 = vrot.lane.b32.xlu0 %v1071, 96
  %v1126 = vpop.permute.xlu0 %1125
  %v1128 = vadd.f32 %v1114, %v1126
  %1130 = vrot.lane.b32.xlu0 %v1128, 64
  %v1131 = vpop.permute.xlu0 %1130
  %v1133 = vmul.f32 %v1123, %v1131
  %1135 = vrot.lane.b32.xlu0 %v1133, 64
  %v1136 = vpop.permute.xlu0 %1135
  %v1138 = vadd.f32 %v1071, %v1136
  %v1139 = vtanh.pop %v1138
  %1141 = vrot.lane.b32.xlu0 %v1139, 96
  %v1142 = vpop.permute.xlu0 %1141
  %v1144 = vsub.f32 %v999, %v1142
  %v1145 = vmul.f32 %v1123, %v1144
  %v1146 = vadd.f32 %v1145, %v1142
  %1148 = vrot.lane.b32.xlu0 %v1146, 96
  %v1149 = vpop.permute.xlu0 %1148
  %v1151 = vsel %vm160, %v1149, %v1070
  %v1152 = vpack.c.bf16 %v1151, %v1151
  %v1154 = vsel %vm266, %v1152, 0
  %1156 = vmatprep.subr.bf16.mxu0 0
  %1157 = vmatpush1.bf16.msra.mxu0 %v258
  %1158 = vmatprep.subr.bf16.mxu0 0
  %1159 = vmatpush1.bf16.msra.mxu0 %v259
  %1160 = vmatprep.subr.bf16.mxu0 0
  %1161 = vmatpush1.bf16.msra.mxu0 %v260
  %1162 = vmatprep.subr.bf16.mxu0 0
  %1163 = vmatpush1.bf16.msra.mxu0 %v261
  %1164 = vmatprep.subr.bf16.mxu0 0
  %1165 = vmatpush1.bf16.msra.mxu0 0
  %1166 = vmatprep.subr.bf16.mxu0 0
  %1167 = vmatpush1.bf16.msra.mxu0 0
  %1168 = vmatprep.subr.bf16.mxu0 0
  %1169 = vmatpush1.bf16.msra.mxu0 0
  %1170 = vmatprep.subr.bf16.mxu0 0
  %1171 = vmatpush1.bf16.msra.mxu0 0
  %1172 = vmatprep.subr.bf16.mxu0 0
  %1173 = vmatpush1.bf16.msra.mxu0 0
  %1174 = vmatprep.subr.bf16.mxu0 0
  %1175 = vmatpush1.bf16.msra.mxu0 0
  %1176 = vmatprep.subr.bf16.mxu0 0
  %1177 = vmatpush1.bf16.msra.mxu0 0
  %1178 = vmatprep.subr.bf16.mxu0 0
  %1179 = vmatpush1.bf16.msra.mxu0 0
  %1180 = vmatprep.subr.bf16.mxu0 0
  %1181 = vmatpush1.bf16.msra.mxu0 0
  %1182 = vmatprep.subr.bf16.mxu0 0
  %1183 = vmatpush1.bf16.msra.mxu0 0
  %1184 = vmatprep.subr.bf16.mxu0 0
  %1185 = vmatpush1.bf16.msra.mxu0 0
  %1186 = vmatprep.subr.bf16.mxu0 0
  %1187 = vmatpush1.bf16.msra.mxu0 0
  %1188 = vmatprep.mubr.bf16.mxu0 0
  %1189 = vmatmul.mubr.bf16.gmra.mrb[0].mxu0 %v1154
  %v1190 = vpop.f32.mrb[0].mxu0
  %v1191 = vadd.f32 %v146, %v1190
  %v1192 = vpop.f32.mrb[0].mxu0
  %v1193 = vpop.f32.mrb[0].mxu0
  %v1194 = vpop.f32.mrb[0].mxu0
  %1195 = vdwg.mxu0
  %v1196 = vmul.f32 %v1191, 0.5
  %v1197 = vtanh.pop %v1196
  %v1198 = vmul.f32 %v1197, 0.5
  %v1199 = vadd.f32 %v1198, 0.5
  %1201 = vrot.lane.b32.xlu0 %v1191, 32
  %v1202 = vpop.permute.xlu0 %1201
  %v1204 = vmul.f32 %v1199, %v1202
  %1206 = vrot.lane.b32.xlu0 %v1204, 64
  %v1207 = vpop.permute.xlu0 %1206
  %v1209 = vadd.f32 %v1191, %v1207
  %v1210 = vtanh.pop %v1209
  %1212 = vrot.lane.b32.xlu0 %v1210, 96
  %v1213 = vpop.permute.xlu0 %1212
  %v1215 = vsub.f32 %v1070, %v1213
  %v1216 = vmul.f32 %v1199, %v1215
  %v1217 = vadd.f32 %v1216, %v1213
  %v1218 = vld [vmem:[#allocation2 + $0x38] sm:$0xff]
  %v1219 = vpack.c.bf16 %v1146, %v1146
  %1221 = vrot.lane.b32.xlu0 %v1219, 96
  %v1222 = vpop.permute.xlu0 %1221
  %v1224 = vsel %vm160, %v1222, 0
  %1226 = vmatprep.subr.bf16.mxu0 0
  %1227 = vmatpush1.bf16.msra.mxu0 %v156
  %1228 = vmatprep.subr.bf16.mxu0 0
  %1229 = vmatpush1.bf16.msra.mxu0 %v157
  %1230 = vmatprep.subr.bf16.mxu0 0
  %1231 = vmatpush1.bf16.msra.mxu0 0
  %1232 = vmatprep.subr.bf16.mxu0 0
  %1233 = vmatpush1.bf16.msra.mxu0 0
  %1234 = vmatprep.subr.bf16.mxu0 0
  %1235 = vmatpush1.bf16.msra.mxu0 0
  %1236 = vmatprep.subr.bf16.mxu0 0
  %1237 = vmatpush1.bf16.msra.mxu0 0
  %1238 = vmatprep.subr.bf16.mxu0 0
  %1239 = vmatpush1.bf16.msra.mxu0 0
  %1240 = vmatprep.subr.bf16.mxu0 0
  %1241 = vmatpush1.bf16.msra.mxu0 0
  %1242 = vmatprep.subr.bf16.mxu0 0
  %1243 = vmatpush1.bf16.msra.mxu0 0
  %1244 = vmatprep.subr.bf16.mxu0 0
  %1245 = vmatpush1.bf16.msra.mxu0 0
  %1246 = vmatprep.subr.bf16.mxu0 0
  %1247 = vmatpush1.bf16.msra.mxu0 0
  %1248 = vmatprep.subr.bf16.mxu0 0
  %1249 = vmatpush1.bf16.msra.mxu0 0
  %1250 = vmatprep.subr.bf16.mxu0 0
  %1251 = vmatpush1.bf16.msra.mxu0 0
  %1252 = vmatprep.subr.bf16.mxu0 0
  %1253 = vmatpush1.bf16.msra.mxu0 0
  %1254 = vmatprep.subr.bf16.mxu0 0
  %1255 = vmatpush1.bf16.msra.mxu0 0
  %1256 = vmatprep.subr.bf16.mxu0 0
  %1257 = vmatpush1.bf16.msra.mxu0 0
  %1258 = vmatprep.mubr.bf16.mxu0 0
  %1259 = vmatmul.mubr.bf16.gmra.mrb[0].mxu0 %v1224
  %v1260 = vpop.f32.mrb[0].mxu0
  %v1261 = vadd.f32 0.0, %v1260
  %v1262 = vpop.f32.mrb[0].mxu0
  %v1263 = vpop.f32.mrb[0].mxu0
  %v1264 = vpop.f32.mrb[0].mxu0
  %1265 = vdwg.mxu0
  %v1266 = vadd.f32 %v1218, %v1261
  %v1267 = vmul.f32 %v1266, 0.5
  %v1268 = vtanh.pop %v1267
  %v1269 = vmul.f32 %v1268, 0.5
  %v1270 = vadd.f32 %v1269, 0.5
  %1272 = vrot.lane.b32.xlu0 %v1218, 96
  %v1273 = vpop.permute.xlu0 %1272
  %v1275 = vadd.f32 %v1261, %v1273
  %1277 = vrot.lane.b32.xlu0 %v1275, 64
  %v1278 = vpop.permute.xlu0 %1277
  %v1280 = vmul.f32 %v1270, %v1278
  %1282 = vrot.lane.b32.xlu0 %v1280, 64
  %v1283 = vpop.permute.xlu0 %1282
  %v1285 = vadd.f32 %v1218, %v1283
  %v1286 = vtanh.pop %v1285
  %1288 = vrot.lane.b32.xlu0 %v1286, 96
  %v1289 = vpop.permute.xlu0 %1288
  %v1291 = vsub.f32 %v1146, %v1289
  %v1292 = vmul.f32 %v1270, %v1291
  %v1293 = vadd.f32 %v1292, %v1289
  %1295 = vrot.lane.b32.xlu0 %v1293, 96
  %v1296 = vpop.permute.xlu0 %1295
  %v1298 = vsel %vm160, %v1296, %v1217
  %v1299 = vpack.c.bf16 %v1298, %v1298
  %v1301 = vsel %vm266, %v1299, 0
  %1303 = vmatprep.subr.bf16.mxu0 0
  %1304 = vmatpush1.bf16.msra.mxu0 %v258
  %1305 = vmatprep.subr.bf16.mxu0 0
  %1306 = vmatpush1.bf16.msra.mxu0 %v259
  %1307 = vmatprep.subr.bf16.mxu0 0
  %1308 = vmatpush1.bf16.msra.mxu0 %v260
  %1309 = vmatprep.subr.bf16.mxu0 0
  %1310 = vmatpush1.bf16.msra.mxu0 %v261
  %1311 = vmatprep.subr.bf16.mxu0 0
  %1312 = vmatpush1.bf16.msra.mxu0 0
  %1313 = vmatprep.subr.bf16.mxu0 0
  %1314 = vmatpush1.bf16.msra.mxu0 0
  %1315 = vmatprep.subr.bf16.mxu0 0
  %1316 = vmatpush1.bf16.msra.mxu0 0
  %1317 = vmatprep.subr.bf16.mxu0 0
  %1318 = vmatpush1.bf16.msra.mxu0 0
  %1319 = vmatprep.subr.bf16.mxu0 0
  %1320 = vmatpush1.bf16.msra.mxu0 0
  %1321 = vmatprep.subr.bf16.mxu0 0
  %1322 = vmatpush1.bf16.msra.mxu0 0
  %1323 = vmatprep.subr.bf16.mxu0 0
  %1324 = vmatpush1.bf16.msra.mxu0 0
  %1325 = vmatprep.subr.bf16.mxu0 0
  %1326 = vmatpush1.bf16.msra.mxu0 0
  %1327 = vmatprep.subr.bf16.mxu0 0
  %1328 = vmatpush1.bf16.msra.mxu0 0
  %1329 = vmatprep.subr.bf16.mxu0 0
  %1330 = vmatpush1.bf16.msra.mxu0 0
  %1331 = vmatprep.subr.bf16.mxu0 0
  %1332 = vmatpush1.bf16.msra.mxu0 0
  %1333 = vmatprep.subr.bf16.mxu0 0
  %1334 = vmatpush1.bf16.msra.mxu0 0
  %1335 = vmatprep.mubr.bf16.mxu0 0
  %1336 = vmatmul.mubr.bf16.gmra.mrb[0].mxu0 %v1301
  %v1337 = vpop.f32.mrb[0].mxu0
  %v1338 = vadd.f32 %v146, %v1337
  %v1339 = vpop.f32.mrb[0].mxu0
  %v1340 = vpop.f32.mrb[0].mxu0
  %v1341 = vpop.f32.mrb[0].mxu0
  %1342 = vdwg.mxu0
  %v1343 = vmul.f32 %v1338, 0.5
  %v1344 = vtanh.pop %v1343
  %v1345 = vmul.f32 %v1344, 0.5
  %v1346 = vadd.f32 %v1345, 0.5
  %1348 = vrot.lane.b32.xlu0 %v1338, 32
  %v1349 = vpop.permute.xlu0 %1348
  %v1351 = vmul.f32 %v1346, %v1349
  %1353 = vrot.lane.b32.xlu0 %v1351, 64
  %v1354 = vpop.permute.xlu0 %1353
  %v1356 = vadd.f32 %v1338, %v1354
  %v1357 = vtanh.pop %v1356
  %1359 = vrot.lane.b32.xlu0 %v1357, 96
  %v1360 = vpop.permute.xlu0 %1359
  %v1362 = vsub.f32 %v1217, %v1360
  %v1363 = vmul.f32 %v1346, %v1362
  %v1364 = vadd.f32 %v1363, %v1360
  %v1365 = vpack.c.bf16 %v1364, %v1364
  %v1366 = vld [vmem:[%s2 + $0x2] sm:$0x1]
  %v1367 = vlaneseq
  %v1368 = vshrl.u32 %v1367, 7
  %v1369 = vsub.s32 0, %v1368
  %v1370 = vrot.slane %v1366, %v1369
  %1372 = vrot.lane.b32.xlu0 %v1365, 96
  %v1373 = vpop.permute.xlu0 %1372
  %v1378 = vunpack.c.l.b16 %v29
  %v1379 = vunpack.c.l.b16 %v30
  %v1380 = vunpack.c.l.b16 %v31
  %v1381 = vunpack.c.l.b16 %v32
  %v1382 = vpack.c.b16 %v1379, %v1378
  %v1383 = vpack.c.b16 %v1381, %v1380
  %v1387 = vsel %vm160, %v1373, 0
  %1389 = vmatprep.subr.bf16.mxu0 0
  %1390 = vmatpush1.bf16.msra.mxu0 %v1382
  %1391 = vmatprep.subr.bf16.mxu0 0
  %1392 = vmatpush1.bf16.msra.mxu0 %v1383
  %1393 = vmatprep.subr.bf16.mxu0 0
  %1394 = vmatpush1.bf16.msra.mxu0 0
  %1395 = vmatprep.subr.bf16.mxu0 0
  %1396 = vmatpush1.bf16.msra.mxu0 0
  %1397 = vmatprep.subr.bf16.mxu0 0
  %1398 = vmatpush1.bf16.msra.mxu0 0
  %1399 = vmatprep.subr.bf16.mxu0 0
  %1400 = vmatpush1.bf16.msra.mxu0 0
  %1401 = vmatprep.subr.bf16.mxu0 0
  %1402 = vmatpush1.bf16.msra.mxu0 0
  %1403 = vmatprep.subr.bf16.mxu0 0
  %1404 = vmatpush1.bf16.msra.mxu0 0
  %1405 = vmatprep.subr.bf16.mxu0 0
  %1406 = vmatpush1.bf16.msra.mxu0 0
  %1407 = vmatprep.subr.bf16.mxu0 0
  %1408 = vmatpush1.bf16.msra.mxu0 0
  %1409 = vmatprep.subr.bf16.mxu0 0
  %1410 = vmatpush1.bf16.msra.mxu0 0
  %1411 = vmatprep.subr.bf16.mxu0 0
  %1412 = vmatpush1.bf16.msra.mxu0 0
  %1413 = vmatprep.subr.bf16.mxu0 0
  %1414 = vmatpush1.bf16.msra.mxu0 0
  %1415 = vmatprep.subr.bf16.mxu0 0
  %1416 = vmatpush1.bf16.msra.mxu0 0
  %1417 = vmatprep.subr.bf16.mxu0 0
  %1418 = vmatpush1.bf16.msra.mxu0 0
  %1419 = vmatprep.subr.bf16.mxu0 0
  %1420 = vmatpush1.bf16.msra.mxu0 0
  %1421 = vmatprep.mubr.bf16.mxu0 0
  %1422 = vmatmul.mubr.bf16.gmra.mrb[0].mxu0 %v1387
  %v1423 = vpop.f32.mrb[0].mxu0
  %v1424 = vadd.f32 %v1370, %v1423
  %v1425 = vpop.f32.mrb[0].mxu0
  %v1426 = vpop.f32.mrb[0].mxu0
  %v1427 = vpop.f32.mrb[0].mxu0
  %1428 = vdwg.mxu0
  %vm1429 = vcmask 31744
  %1430 = vst.msk [vmem:[%s3] sm:$0xff] %vm1429, %v1424
  // Predicated region
  $region14: #{gru_model_forward.1} parent=0 // pred_check
    _
  $region15: #{gru_model_forward.1} parent=0 // pred_check_branch
    %1432 = sbr.rel (0) target = $region17
  $region16: #{gru_model_forward.1} parent=0 // pred_region
    _
  $region17: #{gru_model_forward.1} parent=0 // pred_fallthru
    _
  // Predicated region
  $region18: #{gru_model_forward.1} parent=0 // pred_check
    _
  $region19: #{gru_model_forward.1} parent=0 // pred_check_branch
    %1434 = sbr.rel (0) target = $region21
  $region20: #{gru_model_forward.1} parent=0 // pred_region
    _
  $region21: #{gru_model_forward.1} parent=0 // pred_fallthru
    _

</llo_original>
